<compile_context>
chip_gen: v7x
topology: tpu7x:2x2x1
jax: 0.10.0
libtpu: 0.0.40
codegen_flags: <defaults>
</compile_context>

<pallas_src>
import functools

import jax
import jax.numpy as jnp
from jax.experimental import pallas as pl
from jax.experimental.pallas import tpu as pltpu

EPS = 1e-5


def _banded_conv_weights(w, W):
    """HWIO (3,3,Ci,Co) -> (3, W*Ci, W*Co) block-banded per-dy matrices.

    Row block wi, column block wo holds w[dy, wi-wo+1] when |wi-wo| <= 1, else 0,
    which bakes the dx taps and the horizontal pad-1 edge handling into a single
    MXU-friendly contraction over the whole (W*Ci) lane axis.
    """
    Kh, Kw, Ci, Co = w.shape
    mats = []
    for dy in range(Kh):
        m = jnp.zeros((W * Ci, W * Co), w.dtype)
        for dx in range(Kw):
            # eye(W, k=1-dx)[wi, wo] == 1  <=>  wi == wo + dx - 1
            m = m + jnp.kron(jnp.eye(W, k=1 - dx, dtype=w.dtype), w[dy, dx])
        mats.append(m)
    return jnp.stack(mats)


def _residual_block_kernel(x_ref, w1_ref, g1_ref, b1_ref, w2_ref, g2_ref, b2_ref,
                           out_ref, *, H, W, Co, M):
    """x_ref: (N*H, W*Ci) lane-dense rows.  w*_ref: (3, W*Cin, W*Cout) banded.
    g/b refs: (1, Co).  out_ref: (N*H, W*Co)."""
    x = x_ref[...].astype(jnp.float32)

    def conv3x3(a, wb_ref):
        # a: (NH, W*Cin).  Three big dots (one per dy); vertical halo via
        # row shift + per-image-row mask (no padded buffer).
        nh, lin = a.shape
        h = jax.lax.broadcasted_iota(jnp.int32, (nh, lin), 0) % H
        zero_row = jnp.zeros((1, lin), jnp.float32)
        up = jnp.concatenate([a[1:, :], zero_row], axis=0)      # row r <- a[r+1]
        up = jnp.where(h < H - 1, up, 0.0)
        dn = jnp.concatenate([zero_row, a[:-1, :]], axis=0)     # row r <- a[r-1]
        dn = jnp.where(h > 0, dn, 0.0)
        acc = jnp.dot(a, wb_ref[1], preferred_element_type=jnp.float32)   # dy=1
        acc = acc + jnp.dot(up, wb_ref[2], preferred_element_type=jnp.float32)  # dy=2
        acc = acc + jnp.dot(dn, wb_ref[0], preferred_element_type=jnp.float32)  # dy=0
        return acc

    def batchnorm(acc, g_ref, b_ref):
        # One-pass per-channel stats: reduce rows first (cheap), then fold the
        # W lane groups of Co channels; normalize with a single fused
        # scale/shift tiled once to the lane axis.
        colsum = jnp.sum(acc, axis=0, keepdims=True)          # (1, W*Co)
        colsq = jnp.sum(acc * acc, axis=0, keepdims=True)     # (1, W*Co)
        s = colsum[:, 0:Co]
        ss = colsq[:, 0:Co]
        for w in range(1, W):
            s = s + colsum[:, w * Co:(w + 1) * Co]
            ss = ss + colsq[:, w * Co:(w + 1) * Co]
        mean = s * (1.0 / M)
        var = ss * (1.0 / M) - mean * mean                    # biased variance
        inv = jax.lax.rsqrt(var + EPS)
        scale_c = g_ref[...] * inv                            # (1, Co)
        shift_c = b_ref[...] - mean * scale_c                 # (1, Co)
        scale = jnp.concatenate([scale_c] * W, axis=1)        # (1, W*Co) lane-dense
        shift = jnp.concatenate([shift_c] * W, axis=1)
        return acc * scale + shift

    a1 = conv3x3(x, w1_ref)
    o1 = jnp.maximum(batchnorm(a1, g1_ref, b1_ref), 0.0)
    a2 = conv3x3(o1, w2_ref)
    o2 = batchnorm(a2, g2_ref, b2_ref)
    y = jnp.maximum(o2 + x, 0.0)                              # identity residual
    out_ref[...] = y.astype(out_ref.dtype)


@jax.jit
def residual_block(x_nchw, w1, g1, b1, w2, g2, b2):
    """x_nchw: (N,Ci,H,W) f32.  w1,w2: (3,3,Ci,Co) HWIO.  g*,b*: (C,).
    Returns (N,Co,H,W) like the PyTorch module (downsample=None => Ci==Co)."""
    N, Ci, H, W = x_nchw.shape
    Co = w1.shape[-1]
    if Ci != Co:
        raise ValueError("identity residual path requires in_channels == out_channels")

    # Layout plumbing (wrapper side): NCHW -> lane-dense (N*H, W*C) rows.
    x2d = jnp.transpose(x_nchw, (0, 2, 3, 1)).reshape(N * H, W * Ci)
    w1b = _banded_conv_weights(w1, W)            # (3, W*Ci, W*Co)
    w2b = _banded_conv_weights(w2, W)            # (3, W*Co, W*Co)

    kernel = functools.partial(_residual_block_kernel, H=H, W=W, Co=Co, M=N * H * W)
    vmem = pl.BlockSpec(memory_space=pltpu.MemorySpace.VMEM)

    y2d = pl.pallas_call(
        kernel,
        out_shape=jax.ShapeDtypeStruct((N * H, W * Co), x_nchw.dtype),
        in_specs=[vmem] * 7,
        out_specs=vmem,
        compiler_params=pltpu.CompilerParams(vmem_limit_bytes=32 * 1024 * 1024),
    )(x2d, w1b, g1.reshape(1, -1), b1.reshape(1, -1),
      w2b, g2.reshape(1, -1), b2.reshape(1, -1))

    return jnp.transpose(y2d.reshape(N, H, W, Co), (0, 3, 1, 2))


def residual_block_reference(x_nchw, w1, g1, b1, w2, g2, b2):
    x = jnp.transpose(x_nchw, (0, 2, 3, 1))

    def conv(a, w):
        return jax.lax.conv_general_dilated(
            a, w, window_strides=(1, 1), padding=((1, 1), (1, 1)),
            dimension_numbers=('NHWC', 'HWIO', 'NHWC'))

    def bn(a, g, b):
        m = jnp.mean(a, axis=(0, 1, 2), keepdims=True)
        v = jnp.mean((a - m) ** 2, axis=(0, 1, 2), keepdims=True)
        return (a - m) * jax.lax.rsqrt(v + EPS) * g + b

    o = jax.nn.relu(bn(conv(x, w1), g1, b1))
    o = bn(conv(o, w2), g2, b2)
    o = jax.nn.relu(o + x)
    return jnp.transpose(o, (0, 3, 1, 2))


if __name__ == "__main__":
    N, C, H, W = 2, 8, 16, 16    # in_channels == out_channels (downsample=None)
    key = jax.random.PRNGKey(0)
    kx, kw1, kw2, kg1, kb1, kg2, kb2 = jax.random.split(key, 7)

    x = jax.random.normal(kx, (N, C, H, W), jnp.float32)          # module input, NCHW
    scale = 1.0 / jnp.sqrt(9.0 * C)
    w1 = jax.random.normal(kw1, (3, 3, C, C), jnp.float32) * scale  # HWIO conv weights
    w2 = jax.random.normal(kw2, (3, 3, C, C), jnp.float32) * scale
    g1 = 1.0 + 0.1 * jax.random.normal(kg1, (C,), jnp.float32)
    b1 = 0.1 * jax.random.normal(kb1, (C,), jnp.float32)
    g2 = 1.0 + 0.1 * jax.random.normal(kg2, (C,), jnp.float32)
    b2 = 0.1 * jax.random.normal(kb2, (C,), jnp.float32)

    out = jax.block_until_ready(residual_block(x, w1, g1, b1, w2, g2, b2))
    ref = residual_block_reference(x, w1, g1, b1, w2, g2, b2)

    assert out.shape == (N, C, H, W)
    max_err = float(jnp.max(jnp.abs(out - ref)))
    assert jnp.allclose(out, ref, rtol=1e-4, atol=1e-4), max_err

    print("KERNEL_OK")
</pallas_src>

<mosaic_0001>
module attributes {stable_mosaic.version = 11 : i64} {
  func.func @_residual_block_kernel(%arg0: memref<32x128xf32, #tpu.memory_space<vmem>>, %arg1: memref<3x128x128xf32, #tpu.memory_space<vmem>>, %arg2: memref<1x8xf32, #tpu.memory_space<vmem>>, %arg3: memref<1x8xf32, #tpu.memory_space<vmem>>, %arg4: memref<3x128x128xf32, #tpu.memory_space<vmem>>, %arg5: memref<1x8xf32, #tpu.memory_space<vmem>>, %arg6: memref<1x8xf32, #tpu.memory_space<vmem>>, %arg7: memref<32x128xf32, #tpu.memory_space<vmem>>) attributes {dimension_semantics = [], scalar_prefetch = 0 : i64, scratch_operands = 0 : i64, tpu.core_type = #tpu.core_type<tc>} {
    %c0 = arith.constant 0 : index
    %c0_0 = arith.constant 0 : index
    %0 = vector.load %arg0[%c0, %c0_0] : memref<32x128xf32, #tpu.memory_space<vmem>>, vector<32x128xf32>
    %1 = tpu.iota {dimensions = array<i32: 0>} : vector<32x128xi32>
    %c16_i32 = arith.constant 16 : i32
    %c0_i32 = arith.constant 0 : i32
    %2 = arith.cmpi eq, %c16_i32, %c0_i32 : i32
    %c1_i32 = arith.constant 1 : i32
    %3 = arith.select %2, %c1_i32, %c16_i32 : i32
    %4 = vector.broadcast %3 : i32 to vector<32x128xi32>
    %5 = arith.remsi %1, %4 : vector<32x128xi32>
    %c0_i32_1 = arith.constant 0 : i32
    %6 = vector.broadcast %c0_i32_1 : i32 to vector<32x128xi32>
    %7 = arith.cmpi ne, %5, %6 : vector<32x128xi32>
    %c0_i32_2 = arith.constant 0 : i32
    %8 = vector.broadcast %c0_i32_2 : i32 to vector<32x128xi32>
    %9 = arith.cmpi slt, %5, %8 : vector<32x128xi32>
    %c0_i32_3 = arith.constant 0 : i32
    %10 = arith.cmpi slt, %3, %c0_i32_3 : i32
    %11 = vector.broadcast %10 : i1 to vector<32x128xi1>
    %12 = vector.broadcast %11 : vector<32x128xi1> to vector<32x128xi1>
    %13 = arith.xori %9, %12 : vector<32x128xi1>
    %14 = arith.andi %13, %7 : vector<32x128xi1>
    %15 = vector.broadcast %3 : i32 to vector<32x128xi32>
    %16 = arith.addi %5, %15 : vector<32x128xi32>
    %17 = arith.select %14, %16, %5 : vector<32x128xi1>, vector<32x128xi32>
    %cst = arith.constant 0.000000e+00 : f32
    %18 = vector.broadcast %cst : f32 to vector<1x128xf32>
    %19 = vector.extract_strided_slice %0 {offsets = [1, 0], sizes = [31, 128], strides = [1, 1]} : vector<32x128xf32> to vector<31x128xf32>
    %20 = tpu.concatenate %19, %18 in 0 : vector<31x128xf32>, vector<1x128xf32> -> vector<32x128xf32>
    %c15_i32 = arith.constant 15 : i32
    %21 = vector.broadcast %c15_i32 : i32 to vector<32x128xi32>
    %22 = arith.cmpi slt, %17, %21 : vector<32x128xi32>
    %cst_4 = arith.constant 0.000000e+00 : f32
    %23 = vector.broadcast %cst_4 : f32 to vector<32x128xf32>
    %24 = arith.select %22, %20, %23 : vector<32x128xi1>, vector<32x128xf32>
    %25 = vector.extract_strided_slice %0 {offsets = [0, 0], sizes = [31, 128], strides = [1, 1]} : vector<32x128xf32> to vector<31x128xf32>
    %26 = tpu.concatenate %18, %25 in 0 : vector<1x128xf32>, vector<31x128xf32> -> vector<32x128xf32>
    %c0_i32_5 = arith.constant 0 : i32
    %27 = vector.broadcast %c0_i32_5 : i32 to vector<32x128xi32>
    %28 = arith.cmpi sgt, %17, %27 : vector<32x128xi32>
    %cst_6 = arith.constant 0.000000e+00 : f32
    %29 = vector.broadcast %cst_6 : f32 to vector<32x128xf32>
    %30 = arith.select %28, %26, %29 : vector<32x128xi1>, vector<32x128xf32>
    %c1 = arith.constant 1 : index
    %c0_7 = arith.constant 0 : index
    %c0_8 = arith.constant 0 : index
    %31 = vector.load %arg1[%c1, %c0_7, %c0_8] : memref<3x128x128xf32, #tpu.memory_space<vmem>>, vector<1x128x128xf32>
    %32 = vector.shape_cast %31 : vector<1x128x128xf32> to vector<128x128xf32>
    %cst_9 = arith.constant dense<0.000000e+00> : vector<32x128xf32>
    %33 = tpu.matmul %0, %32, %cst_9 {dimension_numbers = #tpu.dot_dimension_numbers<[1], [0], [0], [1], [0, 0, 1, 1], [], []>} : vector<32x128xf32>, vector<128x128xf32>, vector<32x128xf32> -> vector<32x128xf32>
    %c2 = arith.constant 2 : index
    %c0_10 = arith.constant 0 : index
    %c0_11 = arith.constant 0 : index
    %34 = vector.load %arg1[%c2, %c0_10, %c0_11] : memref<3x128x128xf32, #tpu.memory_space<vmem>>, vector<1x128x128xf32>
    %35 = vector.shape_cast %34 : vector<1x128x128xf32> to vector<128x128xf32>
    %cst_12 = arith.constant dense<0.000000e+00> : vector<32x128xf32>
    %36 = tpu.matmul %24, %35, %cst_12 {dimension_numbers = #tpu.dot_dimension_numbers<[1], [0], [0], [1], [0, 0, 1, 1], [], []>} : vector<32x128xf32>, vector<128x128xf32>, vector<32x128xf32> -> vector<32x128xf32>
    %37 = arith.addf %33, %36 : vector<32x128xf32>
    %c0_13 = arith.constant 0 : index
    %c0_14 = arith.constant 0 : index
    %c0_15 = arith.constant 0 : index
    %38 = vector.load %arg1[%c0_13, %c0_14, %c0_15] : memref<3x128x128xf32, #tpu.memory_space<vmem>>, vector<1x128x128xf32>
    %39 = vector.shape_cast %38 : vector<1x128x128xf32> to vector<128x128xf32>
    %cst_16 = arith.constant dense<0.000000e+00> : vector<32x128xf32>
    %40 = tpu.matmul %30, %39, %cst_16 {dimension_numbers = #tpu.dot_dimension_numbers<[1], [0], [0], [1], [0, 0, 1, 1], [], []>} : vector<32x128xf32>, vector<128x128xf32>, vector<32x128xf32> -> vector<32x128xf32>
    %41 = arith.addf %37, %40 : vector<32x128xf32>
    %cst_17 = arith.constant dense<0.000000e+00> : vector<128xf32>
    %42 = vector.multi_reduction <add>, %41, %cst_17 [0] : vector<32x128xf32> to vector<128xf32>
    %43 = vector.shape_cast %42 : vector<128xf32> to vector<1x128xf32>
    %44 = arith.mulf %41, %41 : vector<32x128xf32>
    %cst_18 = arith.constant dense<0.000000e+00> : vector<128xf32>
    %45 = vector.multi_reduction <add>, %44, %cst_18 [0] : vector<32x128xf32> to vector<128xf32>
    %46 = vector.shape_cast %45 : vector<128xf32> to vector<1x128xf32>
    %47 = vector.extract_strided_slice %43 {offsets = [0, 0], sizes = [1, 8], strides = [1, 1]} : vector<1x128xf32> to vector<1x8xf32>
    %48 = vector.extract_strided_slice %46 {offsets = [0, 0], sizes = [1, 8], strides = [1, 1]} : vector<1x128xf32> to vector<1x8xf32>
    %49 = vector.extract_strided_slice %43 {offsets = [0, 8], sizes = [1, 8], strides = [1, 1]} : vector<1x128xf32> to vector<1x8xf32>
    %50 = arith.addf %47, %49 : vector<1x8xf32>
    %51 = vector.extract_strided_slice %46 {offsets = [0, 8], sizes = [1, 8], strides = [1, 1]} : vector<1x128xf32> to vector<1x8xf32>
    %52 = arith.addf %48, %51 : vector<1x8xf32>
    %53 = vector.extract_strided_slice %43 {offsets = [0, 16], sizes = [1, 8], strides = [1, 1]} : vector<1x128xf32> to vector<1x8xf32>
    %54 = arith.addf %50, %53 : vector<1x8xf32>
    %55 = vector.extract_strided_slice %46 {offsets = [0, 16], sizes = [1, 8], strides = [1, 1]} : vector<1x128xf32> to vector<1x8xf32>
    %56 = arith.addf %52, %55 : vector<1x8xf32>
    %57 = vector.extract_strided_slice %43 {offsets = [0, 24], sizes = [1, 8], strides = [1, 1]} : vector<1x128xf32> to vector<1x8xf32>
    %58 = arith.addf %54, %57 : vector<1x8xf32>
    %59 = vector.extract_strided_slice %46 {offsets = [0, 24], sizes = [1, 8], strides = [1, 1]} : vector<1x128xf32> to vector<1x8xf32>
    %60 = arith.addf %56, %59 : vector<1x8xf32>
    %61 = vector.extract_strided_slice %43 {offsets = [0, 32], sizes = [1, 8], strides = [1, 1]} : vector<1x128xf32> to vector<1x8xf32>
    %62 = arith.addf %58, %61 : vector<1x8xf32>
    %63 = vector.extract_strided_slice %46 {offsets = [0, 32], sizes = [1, 8], strides = [1, 1]} : vector<1x128xf32> to vector<1x8xf32>
    %64 = arith.addf %60, %63 : vector<1x8xf32>
    %65 = vector.extract_strided_slice %43 {offsets = [0, 40], sizes = [1, 8], strides = [1, 1]} : vector<1x128xf32> to vector<1x8xf32>
    %66 = arith.addf %62, %65 : vector<1x8xf32>
    %67 = vector.extract_strided_slice %46 {offsets = [0, 40], sizes = [1, 8], strides = [1, 1]} : vector<1x128xf32> to vector<1x8xf32>
    %68 = arith.addf %64, %67 : vector<1x8xf32>
    %69 = vector.extract_strided_slice %43 {offsets = [0, 48], sizes = [1, 8], strides = [1, 1]} : vector<1x128xf32> to vector<1x8xf32>
    %70 = arith.addf %66, %69 : vector<1x8xf32>
    %71 = vector.extract_strided_slice %46 {offsets = [0, 48], sizes = [1, 8], strides = [1, 1]} : vector<1x128xf32> to vector<1x8xf32>
    %72 = arith.addf %68, %71 : vector<1x8xf32>
    %73 = vector.extract_strided_slice %43 {offsets = [0, 56], sizes = [1, 8], strides = [1, 1]} : vector<1x128xf32> to vector<1x8xf32>
    %74 = arith.addf %70, %73 : vector<1x8xf32>
    %75 = vector.extract_strided_slice %46 {offsets = [0, 56], sizes = [1, 8], strides = [1, 1]} : vector<1x128xf32> to vector<1x8xf32>
    %76 = arith.addf %72, %75 : vector<1x8xf32>
    %77 = vector.extract_strided_slice %43 {offsets = [0, 64], sizes = [1, 8], strides = [1, 1]} : vector<1x128xf32> to vector<1x8xf32>
    %78 = arith.addf %74, %77 : vector<1x8xf32>
    %79 = vector.extract_strided_slice %46 {offsets = [0, 64], sizes = [1, 8], strides = [1, 1]} : vector<1x128xf32> to vector<1x8xf32>
    %80 = arith.addf %76, %79 : vector<1x8xf32>
    %81 = vector.extract_strided_slice %43 {offsets = [0, 72], sizes = [1, 8], strides = [1, 1]} : vector<1x128xf32> to vector<1x8xf32>
    %82 = arith.addf %78, %81 : vector<1x8xf32>
    %83 = vector.extract_strided_slice %46 {offsets = [0, 72], sizes = [1, 8], strides = [1, 1]} : vector<1x128xf32> to vector<1x8xf32>
    %84 = arith.addf %80, %83 : vector<1x8xf32>
    %85 = vector.extract_strided_slice %43 {offsets = [0, 80], sizes = [1, 8], strides = [1, 1]} : vector<1x128xf32> to vector<1x8xf32>
    %86 = arith.addf %82, %85 : vector<1x8xf32>
    %87 = vector.extract_strided_slice %46 {offsets = [0, 80], sizes = [1, 8], strides = [1, 1]} : vector<1x128xf32> to vector<1x8xf32>
    %88 = arith.addf %84, %87 : vector<1x8xf32>
    %89 = vector.extract_strided_slice %43 {offsets = [0, 88], sizes = [1, 8], strides = [1, 1]} : vector<1x128xf32> to vector<1x8xf32>
    %90 = arith.addf %86, %89 : vector<1x8xf32>
    %91 = vector.extract_strided_slice %46 {offsets = [0, 88], sizes = [1, 8], strides = [1, 1]} : vector<1x128xf32> to vector<1x8xf32>
    %92 = arith.addf %88, %91 : vector<1x8xf32>
    %93 = vector.extract_strided_slice %43 {offsets = [0, 96], sizes = [1, 8], strides = [1, 1]} : vector<1x128xf32> to vector<1x8xf32>
    %94 = arith.addf %90, %93 : vector<1x8xf32>
    %95 = vector.extract_strided_slice %46 {offsets = [0, 96], sizes = [1, 8], strides = [1, 1]} : vector<1x128xf32> to vector<1x8xf32>
    %96 = arith.addf %92, %95 : vector<1x8xf32>
    %97 = vector.extract_strided_slice %43 {offsets = [0, 104], sizes = [1, 8], strides = [1, 1]} : vector<1x128xf32> to vector<1x8xf32>
    %98 = arith.addf %94, %97 : vector<1x8xf32>
    %99 = vector.extract_strided_slice %46 {offsets = [0, 104], sizes = [1, 8], strides = [1, 1]} : vector<1x128xf32> to vector<1x8xf32>
    %100 = arith.addf %96, %99 : vector<1x8xf32>
    %101 = vector.extract_strided_slice %43 {offsets = [0, 112], sizes = [1, 8], strides = [1, 1]} : vector<1x128xf32> to vector<1x8xf32>
    %102 = arith.addf %98, %101 : vector<1x8xf32>
    %103 = vector.extract_strided_slice %46 {offsets = [0, 112], sizes = [1, 8], strides = [1, 1]} : vector<1x128xf32> to vector<1x8xf32>
    %104 = arith.addf %100, %103 : vector<1x8xf32>
    %105 = vector.extract_strided_slice %43 {offsets = [0, 120], sizes = [1, 8], strides = [1, 1]} : vector<1x128xf32> to vector<1x8xf32>
    %106 = arith.addf %102, %105 : vector<1x8xf32>
    %107 = vector.extract_strided_slice %46 {offsets = [0, 120], sizes = [1, 8], strides = [1, 1]} : vector<1x128xf32> to vector<1x8xf32>
    %108 = arith.addf %104, %107 : vector<1x8xf32>
    %cst_19 = arith.constant 0.001953125 : f32
    %109 = vector.broadcast %cst_19 : f32 to vector<1x8xf32>
    %110 = arith.mulf %106, %109 : vector<1x8xf32>
    %cst_20 = arith.constant 0.001953125 : f32
    %111 = vector.broadcast %cst_20 : f32 to vector<1x8xf32>
    %112 = arith.mulf %108, %111 : vector<1x8xf32>
    %113 = arith.mulf %110, %110 : vector<1x8xf32>
    %114 = arith.subf %112, %113 : vector<1x8xf32>
    %cst_21 = arith.constant 9.99999974E-6 : f32
    %115 = vector.broadcast %cst_21 : f32 to vector<1x8xf32>
    %116 = arith.addf %114, %115 : vector<1x8xf32>
    %117 = math.rsqrt %116 : vector<1x8xf32>
    %c0_22 = arith.constant 0 : index
    %c0_23 = arith.constant 0 : index
    %118 = vector.load %arg2[%c0_22, %c0_23] : memref<1x8xf32, #tpu.memory_space<vmem>>, vector<1x8xf32>
    %119 = arith.mulf %118, %117 : vector<1x8xf32>
    %c0_24 = arith.constant 0 : index
    %c0_25 = arith.constant 0 : index
    %120 = vector.load %arg3[%c0_24, %c0_25] : memref<1x8xf32, #tpu.memory_space<vmem>>, vector<1x8xf32>
    %121 = arith.mulf %110, %119 : vector<1x8xf32>
    %122 = arith.subf %120, %121 : vector<1x8xf32>
    %123 = tpu.concatenate %119, %119, %119, %119, %119, %119, %119, %119, %119, %119, %119, %119, %119, %119, %119, %119 in 1 : vector<1x8xf32>, vector<1x8xf32>, vector<1x8xf32>, vector<1x8xf32>, vector<1x8xf32>, vector<1x8xf32>, vector<1x8xf32>, vector<1x8xf32>, vector<1x8xf32>, vector<1x8xf32>, vector<1x8xf32>, vector<1x8xf32>, vector<1x8xf32>, vector<1x8xf32>, vector<1x8xf32>, vector<1x8xf32> -> vector<1x128xf32>
    %124 = tpu.concatenate %122, %122, %122, %122, %122, %122, %122, %122, %122, %122, %122, %122, %122, %122, %122, %122 in 1 : vector<1x8xf32>, vector<1x8xf32>, vector<1x8xf32>, vector<1x8xf32>, vector<1x8xf32>, vector<1x8xf32>, vector<1x8xf32>, vector<1x8xf32>, vector<1x8xf32>, vector<1x8xf32>, vector<1x8xf32>, vector<1x8xf32>, vector<1x8xf32>, vector<1x8xf32>, vector<1x8xf32>, vector<1x8xf32> -> vector<1x128xf32>
    %125 = vector.broadcast %123 : vector<1x128xf32> to vector<32x128xf32>
    %126 = arith.mulf %41, %125 : vector<32x128xf32>
    %127 = vector.broadcast %124 : vector<1x128xf32> to vector<32x128xf32>
    %128 = arith.addf %126, %127 : vector<32x128xf32>
    %cst_26 = arith.constant 0.000000e+00 : f32
    %129 = vector.broadcast %cst_26 : f32 to vector<32x128xf32>
    %130 = arith.maximumf %128, %129 : vector<32x128xf32>
    %131 = tpu.iota {dimensions = array<i32: 0>} : vector<32x128xi32>
    %c16_i32_27 = arith.constant 16 : i32
    %c0_i32_28 = arith.constant 0 : i32
    %132 = arith.cmpi eq, %c16_i32_27, %c0_i32_28 : i32
    %c1_i32_29 = arith.constant 1 : i32
    %133 = arith.select %132, %c1_i32_29, %c16_i32_27 : i32
    %134 = vector.broadcast %133 : i32 to vector<32x128xi32>
    %135 = arith.remsi %131, %134 : vector<32x128xi32>
    %c0_i32_30 = arith.constant 0 : i32
    %136 = vector.broadcast %c0_i32_30 : i32 to vector<32x128xi32>
    %137 = arith.cmpi ne, %135, %136 : vector<32x128xi32>
    %c0_i32_31 = arith.constant 0 : i32
    %138 = vector.broadcast %c0_i32_31 : i32 to vector<32x128xi32>
    %139 = arith.cmpi slt, %135, %138 : vector<32x128xi32>
    %c0_i32_32 = arith.constant 0 : i32
    %140 = arith.cmpi slt, %133, %c0_i32_32 : i32
    %141 = vector.broadcast %140 : i1 to vector<32x128xi1>
    %142 = vector.broadcast %141 : vector<32x128xi1> to vector<32x128xi1>
    %143 = arith.xori %139, %142 : vector<32x128xi1>
    %144 = arith.andi %143, %137 : vector<32x128xi1>
    %145 = vector.broadcast %133 : i32 to vector<32x128xi32>
    %146 = arith.addi %135, %145 : vector<32x128xi32>
    %147 = arith.select %144, %146, %135 : vector<32x128xi1>, vector<32x128xi32>
    %cst_33 = arith.constant 0.000000e+00 : f32
    %148 = vector.broadcast %cst_33 : f32 to vector<1x128xf32>
    %149 = vector.extract_strided_slice %130 {offsets = [1, 0], sizes = [31, 128], strides = [1, 1]} : vector<32x128xf32> to vector<31x128xf32>
    %150 = tpu.concatenate %149, %148 in 0 : vector<31x128xf32>, vector<1x128xf32> -> vector<32x128xf32>
    %c15_i32_34 = arith.constant 15 : i32
    %151 = vector.broadcast %c15_i32_34 : i32 to vector<32x128xi32>
    %152 = arith.cmpi slt, %147, %151 : vector<32x128xi32>
    %cst_35 = arith.constant 0.000000e+00 : f32
    %153 = vector.broadcast %cst_35 : f32 to vector<32x128xf32>
    %154 = arith.select %152, %150, %153 : vector<32x128xi1>, vector<32x128xf32>
    %155 = vector.extract_strided_slice %130 {offsets = [0, 0], sizes = [31, 128], strides = [1, 1]} : vector<32x128xf32> to vector<31x128xf32>
    %156 = tpu.concatenate %148, %155 in 0 : vector<1x128xf32>, vector<31x128xf32> -> vector<32x128xf32>
    %c0_i32_36 = arith.constant 0 : i32
    %157 = vector.broadcast %c0_i32_36 : i32 to vector<32x128xi32>
    %158 = arith.cmpi sgt, %147, %157 : vector<32x128xi32>
    %cst_37 = arith.constant 0.000000e+00 : f32
    %159 = vector.broadcast %cst_37 : f32 to vector<32x128xf32>
    %160 = arith.select %158, %156, %159 : vector<32x128xi1>, vector<32x128xf32>
    %c1_38 = arith.constant 1 : index
    %c0_39 = arith.constant 0 : index
    %c0_40 = arith.constant 0 : index
    %161 = vector.load %arg4[%c1_38, %c0_39, %c0_40] : memref<3x128x128xf32, #tpu.memory_space<vmem>>, vector<1x128x128xf32>
    %162 = vector.shape_cast %161 : vector<1x128x128xf32> to vector<128x128xf32>
    %cst_41 = arith.constant dense<0.000000e+00> : vector<32x128xf32>
    %163 = tpu.matmul %130, %162, %cst_41 {dimension_numbers = #tpu.dot_dimension_numbers<[1], [0], [0], [1], [0, 0, 1, 1], [], []>} : vector<32x128xf32>, vector<128x128xf32>, vector<32x128xf32> -> vector<32x128xf32>
    %c2_42 = arith.constant 2 : index
    %c0_43 = arith.constant 0 : index
    %c0_44 = arith.constant 0 : index
    %164 = vector.load %arg4[%c2_42, %c0_43, %c0_44] : memref<3x128x128xf32, #tpu.memory_space<vmem>>, vector<1x128x128xf32>
    %165 = vector.shape_cast %164 : vector<1x128x128xf32> to vector<128x128xf32>
    %cst_45 = arith.constant dense<0.000000e+00> : vector<32x128xf32>
    %166 = tpu.matmul %154, %165, %cst_45 {dimension_numbers = #tpu.dot_dimension_numbers<[1], [0], [0], [1], [0, 0, 1, 1], [], []>} : vector<32x128xf32>, vector<128x128xf32>, vector<32x128xf32> -> vector<32x128xf32>
    %167 = arith.addf %163, %166 : vector<32x128xf32>
    %c0_46 = arith.constant 0 : index
    %c0_47 = arith.constant 0 : index
    %c0_48 = arith.constant 0 : index
    %168 = vector.load %arg4[%c0_46, %c0_47, %c0_48] : memref<3x128x128xf32, #tpu.memory_space<vmem>>, vector<1x128x128xf32>
    %169 = vector.shape_cast %168 : vector<1x128x128xf32> to vector<128x128xf32>
    %cst_49 = arith.constant dense<0.000000e+00> : vector<32x128xf32>
    %170 = tpu.matmul %160, %169, %cst_49 {dimension_numbers = #tpu.dot_dimension_numbers<[1], [0], [0], [1], [0, 0, 1, 1], [], []>} : vector<32x128xf32>, vector<128x128xf32>, vector<32x128xf32> -> vector<32x128xf32>
    %171 = arith.addf %167, %170 : vector<32x128xf32>
    %cst_50 = arith.constant dense<0.000000e+00> : vector<128xf32>
    %172 = vector.multi_reduction <add>, %171, %cst_50 [0] : vector<32x128xf32> to vector<128xf32>
    %173 = vector.shape_cast %172 : vector<128xf32> to vector<1x128xf32>
    %174 = arith.mulf %171, %171 : vector<32x128xf32>
    %cst_51 = arith.constant dense<0.000000e+00> : vector<128xf32>
    %175 = vector.multi_reduction <add>, %174, %cst_51 [0] : vector<32x128xf32> to vector<128xf32>
    %176 = vector.shape_cast %175 : vector<128xf32> to vector<1x128xf32>
    %177 = vector.extract_strided_slice %173 {offsets = [0, 0], sizes = [1, 8], strides = [1, 1]} : vector<1x128xf32> to vector<1x8xf32>
    %178 = vector.extract_strided_slice %176 {offsets = [0, 0], sizes = [1, 8], strides = [1, 1]} : vector<1x128xf32> to vector<1x8xf32>
    %179 = vector.extract_strided_slice %173 {offsets = [0, 8], sizes = [1, 8], strides = [1, 1]} : vector<1x128xf32> to vector<1x8xf32>
    %180 = arith.addf %177, %179 : vector<1x8xf32>
    %181 = vector.extract_strided_slice %176 {offsets = [0, 8], sizes = [1, 8], strides = [1, 1]} : vector<1x128xf32> to vector<1x8xf32>
    %182 = arith.addf %178, %181 : vector<1x8xf32>
    %183 = vector.extract_strided_slice %173 {offsets = [0, 16], sizes = [1, 8], strides = [1, 1]} : vector<1x128xf32> to vector<1x8xf32>
    %184 = arith.addf %180, %183 : vector<1x8xf32>
    %185 = vector.extract_strided_slice %176 {offsets = [0, 16], sizes = [1, 8], strides = [1, 1]} : vector<1x128xf32> to vector<1x8xf32>
    %186 = arith.addf %182, %185 : vector<1x8xf32>
    %187 = vector.extract_strided_slice %173 {offsets = [0, 24], sizes = [1, 8], strides = [1, 1]} : vector<1x128xf32> to vector<1x8xf32>
    %188 = arith.addf %184, %187 : vector<1x8xf32>
    %189 = vector.extract_strided_slice %176 {offsets = [0, 24], sizes = [1, 8], strides = [1, 1]} : vector<1x128xf32> to vector<1x8xf32>
    %190 = arith.addf %186, %189 : vector<1x8xf32>
    %191 = vector.extract_strided_slice %173 {offsets = [0, 32], sizes = [1, 8], strides = [1, 1]} : vector<1x128xf32> to vector<1x8xf32>
    %192 = arith.addf %188, %191 : vector<1x8xf32>
    %193 = vector.extract_strided_slice %176 {offsets = [0, 32], sizes = [1, 8], strides = [1, 1]} : vector<1x128xf32> to vector<1x8xf32>
    %194 = arith.addf %190, %193 : vector<1x8xf32>
    %195 = vector.extract_strided_slice %173 {offsets = [0, 40], sizes = [1, 8], strides = [1, 1]} : vector<1x128xf32> to vector<1x8xf32>
    %196 = arith.addf %192, %195 : vector<1x8xf32>
    %197 = vector.extract_strided_slice %176 {offsets = [0, 40], sizes = [1, 8], strides = [1, 1]} : vector<1x128xf32> to vector<1x8xf32>
    %198 = arith.addf %194, %197 : vector<1x8xf32>
    %199 = vector.extract_strided_slice %173 {offsets = [0, 48], sizes = [1, 8], strides = [1, 1]} : vector<1x128xf32> to vector<1x8xf32>
    %200 = arith.addf %196, %199 : vector<1x8xf32>
    %201 = vector.extract_strided_slice %176 {offsets = [0, 48], sizes = [1, 8], strides = [1, 1]} : vector<1x128xf32> to vector<1x8xf32>
    %202 = arith.addf %198, %201 : vector<1x8xf32>
    %203 = vector.extract_strided_slice %173 {offsets = [0, 56], sizes = [1, 8], strides = [1, 1]} : vector<1x128xf32> to vector<1x8xf32>
    %204 = arith.addf %200, %203 : vector<1x8xf32>
    %205 = vector.extract_strided_slice %176 {offsets = [0, 56], sizes = [1, 8], strides = [1, 1]} : vector<1x128xf32> to vector<1x8xf32>
    %206 = arith.addf %202, %205 : vector<1x8xf32>
    %207 = vector.extract_strided_slice %173 {offsets = [0, 64], sizes = [1, 8], strides = [1, 1]} : vector<1x128xf32> to vector<1x8xf32>
    %208 = arith.addf %204, %207 : vector<1x8xf32>
    %209 = vector.extract_strided_slice %176 {offsets = [0, 64], sizes = [1, 8], strides = [1, 1]} : vector<1x128xf32> to vector<1x8xf32>
    %210 = arith.addf %206, %209 : vector<1x8xf32>
    %211 = vector.extract_strided_slice %173 {offsets = [0, 72], sizes = [1, 8], strides = [1, 1]} : vector<1x128xf32> to vector<1x8xf32>
    %212 = arith.addf %208, %211 : vector<1x8xf32>
    %213 = vector.extract_strided_slice %176 {offsets = [0, 72], sizes = [1, 8], strides = [1, 1]} : vector<1x128xf32> to vector<1x8xf32>
    %214 = arith.addf %210, %213 : vector<1x8xf32>
    %215 = vector.extract_strided_slice %173 {offsets = [0, 80], sizes = [1, 8], strides = [1, 1]} : vector<1x128xf32> to vector<1x8xf32>
    %216 = arith.addf %212, %215 : vector<1x8xf32>
    %217 = vector.extract_strided_slice %176 {offsets = [0, 80], sizes = [1, 8], strides = [1, 1]} : vector<1x128xf32> to vector<1x8xf32>
    %218 = arith.addf %214, %217 : vector<1x8xf32>
    %219 = vector.extract_strided_slice %173 {offsets = [0, 88], sizes = [1, 8], strides = [1, 1]} : vector<1x128xf32> to vector<1x8xf32>
    %220 = arith.addf %216, %219 : vector<1x8xf32>
    %221 = vector.extract_strided_slice %176 {offsets = [0, 88], sizes = [1, 8], strides = [1, 1]} : vector<1x128xf32> to vector<1x8xf32>
    %222 = arith.addf %218, %221 : vector<1x8xf32>
    %223 = vector.extract_strided_slice %173 {offsets = [0, 96], sizes = [1, 8], strides = [1, 1]} : vector<1x128xf32> to vector<1x8xf32>
    %224 = arith.addf %220, %223 : vector<1x8xf32>
    %225 = vector.extract_strided_slice %176 {offsets = [0, 96], sizes = [1, 8], strides = [1, 1]} : vector<1x128xf32> to vector<1x8xf32>
    %226 = arith.addf %222, %225 : vector<1x8xf32>
    %227 = vector.extract_strided_slice %173 {offsets = [0, 104], sizes = [1, 8], strides = [1, 1]} : vector<1x128xf32> to vector<1x8xf32>
    %228 = arith.addf %224, %227 : vector<1x8xf32>
    %229 = vector.extract_strided_slice %176 {offsets = [0, 104], sizes = [1, 8], strides = [1, 1]} : vector<1x128xf32> to vector<1x8xf32>
    %230 = arith.addf %226, %229 : vector<1x8xf32>
    %231 = vector.extract_strided_slice %173 {offsets = [0, 112], sizes = [1, 8], strides = [1, 1]} : vector<1x128xf32> to vector<1x8xf32>
    %232 = arith.addf %228, %231 : vector<1x8xf32>
    %233 = vector.extract_strided_slice %176 {offsets = [0, 112], sizes = [1, 8], strides = [1, 1]} : vector<1x128xf32> to vector<1x8xf32>
    %234 = arith.addf %230, %233 : vector<1x8xf32>
    %235 = vector.extract_strided_slice %173 {offsets = [0, 120], sizes = [1, 8], strides = [1, 1]} : vector<1x128xf32> to vector<1x8xf32>
    %236 = arith.addf %232, %235 : vector<1x8xf32>
    %237 = vector.extract_strided_slice %176 {offsets = [0, 120], sizes = [1, 8], strides = [1, 1]} : vector<1x128xf32> to vector<1x8xf32>
    %238 = arith.addf %234, %237 : vector<1x8xf32>
    %cst_52 = arith.constant 0.001953125 : f32
    %239 = vector.broadcast %cst_52 : f32 to vector<1x8xf32>
    %240 = arith.mulf %236, %239 : vector<1x8xf32>
    %cst_53 = arith.constant 0.001953125 : f32
    %241 = vector.broadcast %cst_53 : f32 to vector<1x8xf32>
    %242 = arith.mulf %238, %241 : vector<1x8xf32>
    %243 = arith.mulf %240, %240 : vector<1x8xf32>
    %244 = arith.subf %242, %243 : vector<1x8xf32>
    %cst_54 = arith.constant 9.99999974E-6 : f32
    %245 = vector.broadcast %cst_54 : f32 to vector<1x8xf32>
    %246 = arith.addf %244, %245 : vector<1x8xf32>
    %247 = math.rsqrt %246 : vector<1x8xf32>
    %c0_55 = arith.constant 0 : index
    %c0_56 = arith.constant 0 : index
    %248 = vector.load %arg5[%c0_55, %c0_56] : memref<1x8xf32, #tpu.memory_space<vmem>>, vector<1x8xf32>
    %249 = arith.mulf %248, %247 : vector<1x8xf32>
    %c0_57 = arith.constant 0 : index
    %c0_58 = arith.constant 0 : index
    %250 = vector.load %arg6[%c0_57, %c0_58] : memref<1x8xf32, #tpu.memory_space<vmem>>, vector<1x8xf32>
    %251 = arith.mulf %240, %249 : vector<1x8xf32>
    %252 = arith.subf %250, %251 : vector<1x8xf32>
    %253 = tpu.concatenate %249, %249, %249, %249, %249, %249, %249, %249, %249, %249, %249, %249, %249, %249, %249, %249 in 1 : vector<1x8xf32>, vector<1x8xf32>, vector<1x8xf32>, vector<1x8xf32>, vector<1x8xf32>, vector<1x8xf32>, vector<1x8xf32>, vector<1x8xf32>, vector<1x8xf32>, vector<1x8xf32>, vector<1x8xf32>, vector<1x8xf32>, vector<1x8xf32>, vector<1x8xf32>, vector<1x8xf32>, vector<1x8xf32> -> vector<1x128xf32>
    %254 = tpu.concatenate %252, %252, %252, %252, %252, %252, %252, %252, %252, %252, %252, %252, %252, %252, %252, %252 in 1 : vector<1x8xf32>, vector<1x8xf32>, vector<1x8xf32>, vector<1x8xf32>, vector<1x8xf32>, vector<1x8xf32>, vector<1x8xf32>, vector<1x8xf32>, vector<1x8xf32>, vector<1x8xf32>, vector<1x8xf32>, vector<1x8xf32>, vector<1x8xf32>, vector<1x8xf32>, vector<1x8xf32>, vector<1x8xf32> -> vector<1x128xf32>
    %255 = vector.broadcast %253 : vector<1x128xf32> to vector<32x128xf32>
    %256 = arith.mulf %171, %255 : vector<32x128xf32>
    %257 = vector.broadcast %254 : vector<1x128xf32> to vector<32x128xf32>
    %258 = arith.addf %256, %257 : vector<32x128xf32>
    %259 = arith.addf %258, %0 : vector<32x128xf32>
    %cst_59 = arith.constant 0.000000e+00 : f32
    %260 = vector.broadcast %cst_59 : f32 to vector<32x128xf32>
    %261 = arith.maximumf %259, %260 : vector<32x128xf32>
    %c0_60 = arith.constant 0 : index
    %c0_61 = arith.constant 0 : index
    %262 = vector.load %arg7[%c0_60, %c0_61] : memref<32x128xf32, #tpu.memory_space<vmem>>, vector<32x128xf32>
    tpu.vector_store %arg7[%c0_60, %c0_61], %261 {strides = array<i32>} : memref<32x128xf32, #tpu.memory_space<vmem>>, vector<32x128xf32>,
    return
  }
}

</mosaic_0001>

<llo_original>
// kernel: residual_block.1
$region0: #{residual_block.1}
  #allocation0 [shape = 'u32[]', space=smem, size = 0x4, offset = 0x4, fixed_abs, tag = 'smem constant byte address 0x4 - core index']
  #allocation1 [shape = 'u32[144,128]{1,0:T(1,128)}', space=vmem, size = 0x12000, scoped, tag = 'internal scratch']
  %s0 = inlined_call_operand.vmem [shape: f32[32,128], index: 0, kind: input, shape index: {}]
  %s1 = inlined_call_operand.vmem [shape: f32[3,128,128], index: 1, kind: input, shape index: {}]
  %s2 = inlined_call_operand.vmem [shape: f32[1,8], index: 2, kind: input, shape index: {}]
  %s3 = inlined_call_operand.vmem [shape: f32[1,8], index: 3, kind: input, shape index: {}]
  %s4 = inlined_call_operand.vmem [shape: f32[3,128,128], index: 4, kind: input, shape index: {}]
  %s5 = inlined_call_operand.vmem [shape: f32[1,8], index: 5, kind: input, shape index: {}]
  %s6 = inlined_call_operand.vmem [shape: f32[1,8], index: 6, kind: input, shape index: {}]
  %s7 = inlined_call_operand.vmem [shape: f32[32,128], index: 7, kind: output, shape index: {}]
  %s8 = sld [smem:[#allocation0]]
  $region38: #{residual_block.1} parent=0
    _
  %s10 = ssub.s32 1, %s8
  %s11 = scalar_select 0, %s10, %s8
  // Predicated region
  $region2: #{residual_block.1} parent=0 // pred_check
    _
  $region3: #{residual_block.1} parent=0 // pred_check_branch
    %13 = sbr.rel (0) target = $region5
  $region4: #{residual_block.1} parent=0 // pred_region
    _
  $region5: #{residual_block.1} parent=0 // pred_fallthru
    _
  // Predicated region
  $region6: #{residual_block.1} parent=0 // pred_check
    _
  $region7: #{residual_block.1} parent=0 // pred_check_branch
    %15 = sbr.rel (0) target = $region9
  $region8: #{residual_block.1} parent=0 // pred_region
    _
  $region9: #{residual_block.1} parent=0 // pred_fallthru
    _
  // Predicated region
  $region10: #{residual_block.1} parent=0 // pred_check
    _
  $region11: #{residual_block.1} parent=0 // pred_check_branch
    %17 = sbr.rel (0) target = $region13
  $region12: #{residual_block.1} parent=0 // pred_region
    _
  $region13: #{residual_block.1} parent=0 // pred_fallthru
    _
  // Predicated region
  $region14: #{residual_block.1} parent=0 // pred_check
    _
  $region15: #{residual_block.1} parent=0 // pred_check_branch
    %19 = sbr.rel (0) target = $region17
  $region16: #{residual_block.1} parent=0 // pred_region
    _
  $region17: #{residual_block.1} parent=0 // pred_fallthru
    _
  // Predicated region
  $region18: #{residual_block.1} parent=0 // pred_check
    _
  $region19: #{residual_block.1} parent=0 // pred_check_branch
    %21 = sbr.rel (0) target = $region21
  $region20: #{residual_block.1} parent=0 // pred_region
    _
  $region21: #{residual_block.1} parent=0 // pred_fallthru
    _
  // Predicated region
  $region22: #{residual_block.1} parent=0 // pred_check
    _
  $region23: #{residual_block.1} parent=0 // pred_check_branch
    %23 = sbr.rel (0) target = $region25
  $region24: #{residual_block.1} parent=0 // pred_region
    _
  $region25: #{residual_block.1} parent=0 // pred_fallthru
    _
  // Predicated region
  $region26: #{residual_block.1} parent=0 // pred_check
    _
  $region27: #{residual_block.1} parent=0 // pred_check_branch
    %25 = sbr.rel (0) target = $region29
  $region28: #{residual_block.1} parent=0 // pred_region
    _
  $region29: #{residual_block.1} parent=0 // pred_fallthru
    _
  %v26 = vld [vmem:[%s0] sm:$0xff]
  %v27 = vld [vmem:[%s0 + $0x8] sm:$0xff]
  %v28 = vld [vmem:[%s0 + $0x10] sm:$0xff]
  %v29 = vld [vmem:[%s0 + $0x18] sm:$0xff]
  %v30 = vlaneseq
  %v31 = vshrl.u32 %v30, 7
  %v32 = vadd.s32 %v31, 8
  %v33 = vadd.s32 %v31, 16
  %v34 = vadd.s32 %v31, 24
  %vm35 = vcmp.lt.s32.totalorder %v31, 0
  %v36 = vsub.s32 0, %v31
  %v37 = vsel %vm35, %v36, %v31
  %v38 = vshrl.u32 %v37, 4
  %v39 = vand.u32 %v37, 15
  %v40 = vsub.s32 0, %v39
  %v41 = vsel %vm35, %v40, %v39
  %vm42 = vcmp.lt.s32.totalorder %v32, 0
  %v43 = vsub.s32 0, %v32
  %v44 = vsel %vm42, %v43, %v32
  %v45 = vshrl.u32 %v44, 4
  %v46 = vand.u32 %v44, 15
  %v47 = vsub.s32 0, %v46
  %v48 = vsel %vm42, %v47, %v46
  %vm49 = vcmp.lt.s32.totalorder %v33, 0
  %v50 = vsub.s32 0, %v33
  %v51 = vsel %vm49, %v50, %v33
  %v52 = vshrl.u32 %v51, 4
  %v53 = vand.u32 %v51, 15
  %v54 = vsub.s32 0, %v53
  %v55 = vsel %vm49, %v54, %v53
  %vm56 = vcmp.lt.s32.totalorder %v34, 0
  %v57 = vsub.s32 0, %v34
  %v58 = vsel %vm56, %v57, %v34
  %v59 = vshrl.u32 %v58, 4
  %v60 = vand.u32 %v58, 15
  %v61 = vsub.s32 0, %v60
  %v62 = vsel %vm56, %v61, %v60
  %vm63 = vcmp.ne.s32.totalorder %v41, 0
  %vm64 = vcmp.ne.s32.totalorder %v48, 0
  %vm65 = vcmp.ne.s32.totalorder %v55, 0
  %vm66 = vcmp.ne.s32.totalorder %v62, 0
  %vm67 = vcmp.lt.s32.totalorder %v41, 0
  %vm68 = vcmp.lt.s32.totalorder %v48, 0
  %vm69 = vcmp.lt.s32.totalorder %v55, 0
  %vm70 = vcmp.lt.s32.totalorder %v62, 0
  %vm71 = vmand %vm67, %vm63
  %vm72 = vmand %vm68, %vm64
  %vm73 = vmand %vm69, %vm65
  %vm74 = vmand %vm70, %vm66
  %v75 = vadd.s32 %v41, 16
  %v76 = vadd.s32 %v48, 16
  %v77 = vadd.s32 %v55, 16
  %v78 = vadd.s32 %v62, 16
  %v79 = vsel %vm71, %v75, %v41
  %v80 = vsel %vm72, %v76, %v48
  %v81 = vsel %vm73, %v77, %v55
  %v82 = vsel %vm74, %v78, %v62
  %vm87 = vcmask 1046528
  %v88 = vrot.slane %v26, 1
  %v89 = vrot.slane %v27, 1
  %v90 = vsel %vm87, %v88, %v89
  %v91 = vrot.slane %v28, 1
  %v92 = vsel %vm87, %v89, %v91
  %v93 = vrot.slane %v29, 1
  %v94 = vsel %vm87, %v91, %v93
  %v99 = vsel %vm87, %v93, 0.0
  %vm100 = vcmp.lt.s32.totalorder %v79, 15
  %vm101 = vcmp.lt.s32.totalorder %v80, 15
  %vm102 = vcmp.lt.s32.totalorder %v81, 15
  %vm103 = vcmp.lt.s32.totalorder %v82, 15
  %v104 = vsel %vm100, %v90, 0.0
  %v105 = vsel %vm101, %v92, 0.0
  %v106 = vsel %vm102, %v94, 0.0
  %v107 = vsel %vm103, %v99, 0.0
  %vm108 = vcmask 1040384
  %v109 = vrot.slane %v26, 7
  %v110 = vrot.slane %v27, 7
  %v111 = vsel %vm108, %v109, %v110
  %v112 = vrot.slane %v28, 7
  %v113 = vsel %vm108, %v110, %v112
  %v114 = vrot.slane %v29, 7
  %v115 = vsel %vm108, %v112, %v114
  %v120 = vsel %vm108, 0.0, %v109
  %vm121 = vcmp.gt.s32.totalorder %v79, 0
  %vm122 = vcmp.gt.s32.totalorder %v80, 0
  %vm123 = vcmp.gt.s32.totalorder %v81, 0
  %vm124 = vcmp.gt.s32.totalorder %v82, 0
  %v125 = vsel %vm121, %v120, 0.0
  %v126 = vsel %vm122, %v111, 0.0
  %v127 = vsel %vm123, %v113, 0.0
  %v128 = vsel %vm124, %v115, 0.0
  %s129 = scalar_lea.vmem %s1, 128
  %v130 = vld [vmem:[%s129] sm:$0xff]
  %v131 = vld [vmem:[%s129 + $0x8] sm:$0xff]
  %v132 = vld [vmem:[%s129 + $0x10] sm:$0xff]
  %v133 = vld [vmem:[%s129 + $0x18] sm:$0xff]
  %v134 = vld [vmem:[%s129 + $0x20] sm:$0xff]
  %v135 = vld [vmem:[%s129 + $0x28] sm:$0xff]
  %v136 = vld [vmem:[%s129 + $0x30] sm:$0xff]
  %v137 = vld [vmem:[%s129 + $0x38] sm:$0xff]
  %v138 = vld [vmem:[%s129 + $0x40] sm:$0xff]
  %v139 = vld [vmem:[%s129 + $0x48] sm:$0xff]
  %v140 = vld [vmem:[%s129 + $0x50] sm:$0xff]
  %v141 = vld [vmem:[%s129 + $0x58] sm:$0xff]
  %v142 = vld [vmem:[%s129 + $0x60] sm:$0xff]
  %v143 = vld [vmem:[%s129 + $0x68] sm:$0xff]
  %v144 = vld [vmem:[%s129 + $0x70] sm:$0xff]
  %v145 = vld [vmem:[%s129 + $0x78] sm:$0xff]
  %s146 = scalar_lea.vmem %s1, 256
  %v147 = vld [vmem:[%s146] sm:$0xff]
  %v148 = vld [vmem:[%s146 + $0x8] sm:$0xff]
  %v149 = vld [vmem:[%s146 + $0x10] sm:$0xff]
  %v150 = vld [vmem:[%s146 + $0x18] sm:$0xff]
  %v151 = vld [vmem:[%s146 + $0x20] sm:$0xff]
  %v152 = vld [vmem:[%s146 + $0x28] sm:$0xff]
  %v153 = vld [vmem:[%s146 + $0x30] sm:$0xff]
  %v154 = vld [vmem:[%s146 + $0x38] sm:$0xff]
  %v155 = vld [vmem:[%s146 + $0x40] sm:$0xff]
  %v156 = vld [vmem:[%s146 + $0x48] sm:$0xff]
  %v157 = vld [vmem:[%s146 + $0x50] sm:$0xff]
  %v158 = vld [vmem:[%s146 + $0x58] sm:$0xff]
  %v159 = vld [vmem:[%s146 + $0x60] sm:$0xff]
  %v160 = vld [vmem:[%s146 + $0x68] sm:$0xff]
  %v161 = vld [vmem:[%s146 + $0x70] sm:$0xff]
  %v162 = vld [vmem:[%s146 + $0x78] sm:$0xff]
  %163 = vmatprep.subr.mxu0 0.0
  %164 = vmatpush1.msra.mxu0 %v147
  %165 = vmatprep.subr.mxu0 0.0
  %166 = vmatpush1.msra.mxu0 %v148
  %167 = vmatprep.subr.mxu0 0.0
  %168 = vmatpush1.msra.mxu0 %v149
  %169 = vmatprep.subr.mxu0 0.0
  %170 = vmatpush1.msra.mxu0 %v150
  %171 = vmatprep.subr.mxu0 0.0
  %172 = vmatpush1.msra.mxu0 %v151
  %173 = vmatprep.subr.mxu0 0.0
  %174 = vmatpush1.msra.mxu0 %v152
  %175 = vmatprep.subr.mxu0 0.0
  %176 = vmatpush1.msra.mxu0 %v153
  %177 = vmatprep.subr.mxu0 0.0
  %178 = vmatpush1.msra.mxu0 %v154
  %179 = vmatprep.subr.mxu0 0.0
  %180 = vmatpush1.msra.mxu0 %v155
  %181 = vmatprep.subr.mxu0 0.0
  %182 = vmatpush1.msra.mxu0 %v156
  %183 = vmatprep.subr.mxu0 0.0
  %184 = vmatpush1.msra.mxu0 %v157
  %185 = vmatprep.subr.mxu0 0.0
  %186 = vmatpush1.msra.mxu0 %v158
  %187 = vmatprep.subr.mxu0 0.0
  %188 = vmatpush1.msra.mxu0 %v159
  %189 = vmatprep.subr.mxu0 0.0
  %190 = vmatpush1.msra.mxu0 %v160
  %191 = vmatprep.subr.mxu0 0.0
  %192 = vmatpush1.msra.mxu0 %v161
  %193 = vmatprep.subr.mxu0 0.0
  %194 = vmatpush1.msra.mxu0 %v162
  %195 = vmatprep.subr.mxu0 0.0
  %196 = vmatpush1.msra.mxu0 0.0
  %197 = vmatprep.subr.mxu0 0.0
  %198 = vmatpush1.msra.mxu0 0.0
  %199 = vmatprep.subr.mxu0 0.0
  %200 = vmatpush1.msra.mxu0 0.0
  %201 = vmatprep.subr.mxu0 0.0
  %202 = vmatpush1.msra.mxu0 0.0
  %203 = vmatprep.subr.mxu0 0.0
  %204 = vmatpush1.msra.mxu0 0.0
  %205 = vmatprep.subr.mxu0 0.0
  %206 = vmatpush1.msra.mxu0 0.0
  %207 = vmatprep.subr.mxu0 0.0
  %208 = vmatpush1.msra.mxu0 0.0
  %209 = vmatprep.subr.mxu0 0.0
  %210 = vmatpush1.msra.mxu0 0.0
  %211 = vmatprep.subr.mxu0 0.0
  %212 = vmatpush1.msra.mxu0 0.0
  %213 = vmatprep.subr.mxu0 0.0
  %214 = vmatpush1.msra.mxu0 0.0
  %215 = vmatprep.subr.mxu0 0.0
  %216 = vmatpush1.msra.mxu0 0.0
  %217 = vmatprep.subr.mxu0 0.0
  %218 = vmatpush1.msra.mxu0 0.0
  %219 = vmatprep.subr.mxu0 0.0
  %220 = vmatpush1.msra.mxu0 0.0
  %221 = vmatprep.subr.mxu0 0.0
  %222 = vmatpush1.msra.mxu0 0.0
  %223 = vmatprep.subr.mxu0 0.0
  %224 = vmatpush1.msra.mxu0 0.0
  %225 = vmatprep.subr.mxu0 0.0
  %226 = vmatpush1.msra.mxu0 0.0
  %227 = vmatprep.mubr.f32.mxu0 0.0
  %228 = vmatmul.mubr.f32.gmra.mrb[0].mxu0 %v104
  %v229 = vpop.f32.mrb[0].mxu0
  %v230 = vadd.f32 0.0, %v229
  %v231 = vpop.f32.mrb[0].mxu0
  %232 = vmatprep.mubr.f32.mxu0 0.0
  %233 = vmatmul.mubr.f32.gmra.mrb[0].mxu0 %v105
  %v234 = vpop.f32.mrb[0].mxu0
  %v235 = vadd.f32 0.0, %v234
  %v236 = vpop.f32.mrb[0].mxu0
  %237 = vmatprep.mubr.f32.mxu0 0.0
  %238 = vmatmul.mubr.f32.gmra.mrb[0].mxu0 %v106
  %v239 = vpop.f32.mrb[0].mxu0
  %v240 = vadd.f32 0.0, %v239
  %v241 = vpop.f32.mrb[0].mxu0
  %242 = vmatprep.mubr.f32.mxu0 0.0
  %243 = vmatmul.mubr.f32.gmra.mrb[0].mxu0 %v107
  %v244 = vpop.f32.mrb[0].mxu0
  %v245 = vadd.f32 0.0, %v244
  %v246 = vpop.f32.mrb[0].mxu0
  %247 = vdwg.mxu0
  %248 = vmatprep.subr.mxu0 0.0
  %249 = vmatpush1.msra.mxu0 %v130
  %250 = vmatprep.subr.mxu0 0.0
  %251 = vmatpush1.msra.mxu0 %v131
  %252 = vmatprep.subr.mxu0 0.0
  %253 = vmatpush1.msra.mxu0 %v132
  %254 = vmatprep.subr.mxu0 0.0
  %255 = vmatpush1.msra.mxu0 %v133
  %256 = vmatprep.subr.mxu0 0.0
  %257 = vmatpush1.msra.mxu0 %v134
  %258 = vmatprep.subr.mxu0 0.0
  %259 = vmatpush1.msra.mxu0 %v135
  %260 = vmatprep.subr.mxu0 0.0
  %261 = vmatpush1.msra.mxu0 %v136
  %262 = vmatprep.subr.mxu0 0.0
  %263 = vmatpush1.msra.mxu0 %v137
  %264 = vmatprep.subr.mxu0 0.0
  %265 = vmatpush1.msra.mxu0 %v138
  %266 = vmatprep.subr.mxu0 0.0
  %267 = vmatpush1.msra.mxu0 %v139
  %268 = vmatprep.subr.mxu0 0.0
  %269 = vmatpush1.msra.mxu0 %v140
  %270 = vmatprep.subr.mxu0 0.0
  %271 = vmatpush1.msra.mxu0 %v141
  %272 = vmatprep.subr.mxu0 0.0
  %273 = vmatpush1.msra.mxu0 %v142
  %274 = vmatprep.subr.mxu0 0.0
  %275 = vmatpush1.msra.mxu0 %v143
  %276 = vmatprep.subr.mxu0 0.0
  %277 = vmatpush1.msra.mxu0 %v144
  %278 = vmatprep.subr.mxu0 0.0
  %279 = vmatpush1.msra.mxu0 %v145
  %280 = vmatprep.subr.mxu0 0.0
  %281 = vmatpush1.msra.mxu0 0.0
  %282 = vmatprep.subr.mxu0 0.0
  %283 = vmatpush1.msra.mxu0 0.0
  %284 = vmatprep.subr.mxu0 0.0
  %285 = vmatpush1.msra.mxu0 0.0
  %286 = vmatprep.subr.mxu0 0.0
  %287 = vmatpush1.msra.mxu0 0.0
  %288 = vmatprep.subr.mxu0 0.0
  %289 = vmatpush1.msra.mxu0 0.0
  %290 = vmatprep.subr.mxu0 0.0
  %291 = vmatpush1.msra.mxu0 0.0
  %292 = vmatprep.subr.mxu0 0.0
  %293 = vmatpush1.msra.mxu0 0.0
  %294 = vmatprep.subr.mxu0 0.0
  %295 = vmatpush1.msra.mxu0 0.0
  %296 = vmatprep.subr.mxu0 0.0
  %297 = vmatpush1.msra.mxu0 0.0
  %298 = vmatprep.subr.mxu0 0.0
  %299 = vmatpush1.msra.mxu0 0.0
  %300 = vmatprep.subr.mxu0 0.0
  %301 = vmatpush1.msra.mxu0 0.0
  %302 = vmatprep.subr.mxu0 0.0
  %303 = vmatpush1.msra.mxu0 0.0
  %304 = vmatprep.subr.mxu0 0.0
  %305 = vmatpush1.msra.mxu0 0.0
  %306 = vmatprep.subr.mxu0 0.0
  %307 = vmatpush1.msra.mxu0 0.0
  %308 = vmatprep.subr.mxu0 0.0
  %309 = vmatpush1.msra.mxu0 0.0
  %310 = vmatprep.subr.mxu0 0.0
  %311 = vmatpush1.msra.mxu0 0.0
  %312 = vmatprep.mubr.f32.mxu0 0.0
  %313 = vmatmul.mubr.f32.gmra.mrb[0].mxu0 %v26
  %v314 = vpop.f32.mrb[0].mxu0
  %v315 = vadd.f32 %v230, %v314
  %v316 = vpop.f32.mrb[0].mxu0
  %317 = vmatprep.mubr.f32.mxu0 0.0
  %318 = vmatmul.mubr.f32.gmra.mrb[0].mxu0 %v27
  %v319 = vpop.f32.mrb[0].mxu0
  %v320 = vadd.f32 %v235, %v319
  %v321 = vpop.f32.mrb[0].mxu0
  %322 = vmatprep.mubr.f32.mxu0 0.0
  %323 = vmatmul.mubr.f32.gmra.mrb[0].mxu0 %v28
  %v324 = vpop.f32.mrb[0].mxu0
  %v325 = vadd.f32 %v240, %v324
  %v326 = vpop.f32.mrb[0].mxu0
  %327 = vmatprep.mubr.f32.mxu0 0.0
  %328 = vmatmul.mubr.f32.gmra.mrb[0].mxu0 %v29
  %v329 = vpop.f32.mrb[0].mxu0
  %v330 = vadd.f32 %v245, %v329
  %v331 = vpop.f32.mrb[0].mxu0
  %332 = vdwg.mxu0
  %v333 = vld [vmem:[%s1] sm:$0xff]
  %v334 = vld [vmem:[%s1 + $0x8] sm:$0xff]
  %v335 = vld [vmem:[%s1 + $0x10] sm:$0xff]
  %v336 = vld [vmem:[%s1 + $0x18] sm:$0xff]
  %v337 = vld [vmem:[%s1 + $0x20] sm:$0xff]
  %v338 = vld [vmem:[%s1 + $0x28] sm:$0xff]
  %v339 = vld [vmem:[%s1 + $0x30] sm:$0xff]
  %v340 = vld [vmem:[%s1 + $0x38] sm:$0xff]
  %v341 = vld [vmem:[%s1 + $0x40] sm:$0xff]
  %v342 = vld [vmem:[%s1 + $0x48] sm:$0xff]
  %v343 = vld [vmem:[%s1 + $0x50] sm:$0xff]
  %v344 = vld [vmem:[%s1 + $0x58] sm:$0xff]
  %v345 = vld [vmem:[%s1 + $0x60] sm:$0xff]
  %v346 = vld [vmem:[%s1 + $0x68] sm:$0xff]
  %v347 = vld [vmem:[%s1 + $0x70] sm:$0xff]
  %v348 = vld [vmem:[%s1 + $0x78] sm:$0xff]
  %349 = vmatprep.subr.mxu0 0.0
  %350 = vmatpush1.msra.mxu0 %v333
  %351 = vmatprep.subr.mxu0 0.0
  %352 = vmatpush1.msra.mxu0 %v334
  %353 = vmatprep.subr.mxu0 0.0
  %354 = vmatpush1.msra.mxu0 %v335
  %355 = vmatprep.subr.mxu0 0.0
  %356 = vmatpush1.msra.mxu0 %v336
  %357 = vmatprep.subr.mxu0 0.0
  %358 = vmatpush1.msra.mxu0 %v337
  %359 = vmatprep.subr.mxu0 0.0
  %360 = vmatpush1.msra.mxu0 %v338
  %361 = vmatprep.subr.mxu0 0.0
  %362 = vmatpush1.msra.mxu0 %v339
  %363 = vmatprep.subr.mxu0 0.0
  %364 = vmatpush1.msra.mxu0 %v340
  %365 = vmatprep.subr.mxu0 0.0
  %366 = vmatpush1.msra.mxu0 %v341
  %367 = vmatprep.subr.mxu0 0.0
  %368 = vmatpush1.msra.mxu0 %v342
  %369 = vmatprep.subr.mxu0 0.0
  %370 = vmatpush1.msra.mxu0 %v343
  %371 = vmatprep.subr.mxu0 0.0
  %372 = vmatpush1.msra.mxu0 %v344
  %373 = vmatprep.subr.mxu0 0.0
  %374 = vmatpush1.msra.mxu0 %v345
  %375 = vmatprep.subr.mxu0 0.0
  %376 = vmatpush1.msra.mxu0 %v346
  %377 = vmatprep.subr.mxu0 0.0
  %378 = vmatpush1.msra.mxu0 %v347
  %379 = vmatprep.subr.mxu0 0.0
  %380 = vmatpush1.msra.mxu0 %v348
  %381 = vmatprep.subr.mxu0 0.0
  %382 = vmatpush1.msra.mxu0 0.0
  %383 = vmatprep.subr.mxu0 0.0
  %384 = vmatpush1.msra.mxu0 0.0
  %385 = vmatprep.subr.mxu0 0.0
  %386 = vmatpush1.msra.mxu0 0.0
  %387 = vmatprep.subr.mxu0 0.0
  %388 = vmatpush1.msra.mxu0 0.0
  %389 = vmatprep.subr.mxu0 0.0
  %390 = vmatpush1.msra.mxu0 0.0
  %391 = vmatprep.subr.mxu0 0.0
  %392 = vmatpush1.msra.mxu0 0.0
  %393 = vmatprep.subr.mxu0 0.0
  %394 = vmatpush1.msra.mxu0 0.0
  %395 = vmatprep.subr.mxu0 0.0
  %396 = vmatpush1.msra.mxu0 0.0
  %397 = vmatprep.subr.mxu0 0.0
  %398 = vmatpush1.msra.mxu0 0.0
  %399 = vmatprep.subr.mxu0 0.0
  %400 = vmatpush1.msra.mxu0 0.0
  %401 = vmatprep.subr.mxu0 0.0
  %402 = vmatpush1.msra.mxu0 0.0
  %403 = vmatprep.subr.mxu0 0.0
  %404 = vmatpush1.msra.mxu0 0.0
  %405 = vmatprep.subr.mxu0 0.0
  %406 = vmatpush1.msra.mxu0 0.0
  %407 = vmatprep.subr.mxu0 0.0
  %408 = vmatpush1.msra.mxu0 0.0
  %409 = vmatprep.subr.mxu0 0.0
  %410 = vmatpush1.msra.mxu0 0.0
  %411 = vmatprep.subr.mxu0 0.0
  %412 = vmatpush1.msra.mxu0 0.0
  %413 = vmatprep.mubr.f32.mxu0 0.0
  %414 = vmatmul.mubr.f32.gmra.mrb[0].mxu0 %v125
  %v415 = vpop.f32.mrb[0].mxu0
  %v416 = vadd.f32 0.0, %v415
  %v417 = vpop.f32.mrb[0].mxu0
  %418 = vmatprep.mubr.f32.mxu0 0.0
  %419 = vmatmul.mubr.f32.gmra.mrb[0].mxu0 %v126
  %v420 = vpop.f32.mrb[0].mxu0
  %v421 = vadd.f32 0.0, %v420
  %v422 = vpop.f32.mrb[0].mxu0
  %423 = vmatprep.mubr.f32.mxu0 0.0
  %424 = vmatmul.mubr.f32.gmra.mrb[0].mxu0 %v127
  %v425 = vpop.f32.mrb[0].mxu0
  %v426 = vadd.f32 0.0, %v425
  %v427 = vpop.f32.mrb[0].mxu0
  %428 = vmatprep.mubr.f32.mxu0 0.0
  %429 = vmatmul.mubr.f32.gmra.mrb[0].mxu0 %v128
  %v430 = vpop.f32.mrb[0].mxu0
  %v431 = vadd.f32 0.0, %v430
  %v432 = vpop.f32.mrb[0].mxu0
  %433 = vdwg.mxu0
  %v434 = vadd.f32 %v315, %v416
  %v435 = vadd.f32 %v320, %v421
  %v436 = vadd.f32 %v325, %v426
  %v437 = vadd.f32 %v330, %v431
  %v438 = vadd.f32 %v434, %v435
  %v439 = vadd.f32 %v438, %v436
  %v440 = vadd.f32 %v439, %v437
  %v441 = vrot.slane %v440, 4
  %v442 = vadd.f32 %v440, %v441
  %v443 = vrot.slane %v442, 2
  %v444 = vadd.f32 %v442, %v443
  %v445 = vrot.slane %v444, 1
  %v446 = vadd.f32 %v444, %v445
  %v447 = vmul.f32 %v434, %v434
  %v448 = vmul.f32 %v435, %v435
  %v449 = vmul.f32 %v436, %v436
  %v450 = vmul.f32 %v437, %v437
  %v451 = vadd.f32 %v447, %v448
  %v452 = vadd.f32 %v451, %v449
  %v453 = vadd.f32 %v452, %v450
  %v454 = vrot.slane %v453, 4
  %v455 = vadd.f32 %v453, %v454
  %v456 = vrot.slane %v455, 2
  %v457 = vadd.f32 %v455, %v456
  %v458 = vrot.slane %v457, 1
  %v459 = vadd.f32 %v457, %v458
  %461 = vrot.lane.b32.xlu0 %v446, 120
  %v462 = vpop.permute.xlu0 %461
  %v464 = vadd.f32 %v446, %v462
  %466 = vrot.lane.b32.xlu0 %v459, 120
  %v467 = vpop.permute.xlu0 %466
  %v469 = vadd.f32 %v459, %v467
  %470 = vrot.lane.b32.xlu0 %v446, 112
  %v471 = vpop.permute.xlu0 %470
  %v473 = vadd.f32 %v464, %v471
  %474 = vrot.lane.b32.xlu0 %v459, 112
  %v475 = vpop.permute.xlu0 %474
  %v477 = vadd.f32 %v469, %v475
  %478 = vrot.lane.b32.xlu0 %v446, 104
  %v479 = vpop.permute.xlu0 %478
  %v481 = vadd.f32 %v473, %v479
  %482 = vrot.lane.b32.xlu0 %v459, 104
  %v483 = vpop.permute.xlu0 %482
  %v485 = vadd.f32 %v477, %v483
  %486 = vrot.lane.b32.xlu0 %v446, 96
  %v487 = vpop.permute.xlu0 %486
  %v489 = vadd.f32 %v481, %v487
  %490 = vrot.lane.b32.xlu0 %v459, 96
  %v491 = vpop.permute.xlu0 %490
  %v493 = vadd.f32 %v485, %v491
  %494 = vrot.lane.b32.xlu0 %v446, 88
  %v495 = vpop.permute.xlu0 %494
  %v497 = vadd.f32 %v489, %v495
  %498 = vrot.lane.b32.xlu0 %v459, 88
  %v499 = vpop.permute.xlu0 %498
  %v501 = vadd.f32 %v493, %v499
  %502 = vrot.lane.b32.xlu0 %v446, 80
  %v503 = vpop.permute.xlu0 %502
  %v505 = vadd.f32 %v497, %v503
  %506 = vrot.lane.b32.xlu0 %v459, 80
  %v507 = vpop.permute.xlu0 %506
  %v509 = vadd.f32 %v501, %v507
  %510 = vrot.lane.b32.xlu0 %v446, 72
  %v511 = vpop.permute.xlu0 %510
  %v513 = vadd.f32 %v505, %v511
  %514 = vrot.lane.b32.xlu0 %v459, 72
  %v515 = vpop.permute.xlu0 %514
  %v517 = vadd.f32 %v509, %v515
  %518 = vrot.lane.b32.xlu0 %v446, 64
  %v519 = vpop.permute.xlu0 %518
  %v521 = vadd.f32 %v513, %v519
  %522 = vrot.lane.b32.xlu0 %v459, 64
  %v523 = vpop.permute.xlu0 %522
  %v525 = vadd.f32 %v517, %v523
  %526 = vrot.lane.b32.xlu0 %v446, 56
  %v527 = vpop.permute.xlu0 %526
  %v529 = vadd.f32 %v521, %v527
  %530 = vrot.lane.b32.xlu0 %v459, 56
  %v531 = vpop.permute.xlu0 %530
  %v533 = vadd.f32 %v525, %v531
  %534 = vrot.lane.b32.xlu0 %v446, 48
  %v535 = vpop.permute.xlu0 %534
  %v537 = vadd.f32 %v529, %v535
  %538 = vrot.lane.b32.xlu0 %v459, 48
  %v539 = vpop.permute.xlu0 %538
  %v541 = vadd.f32 %v533, %v539
  %542 = vrot.lane.b32.xlu0 %v446, 40
  %v543 = vpop.permute.xlu0 %542
  %v545 = vadd.f32 %v537, %v543
  %546 = vrot.lane.b32.xlu0 %v459, 40
  %v547 = vpop.permute.xlu0 %546
  %v549 = vadd.f32 %v541, %v547
  %550 = vrot.lane.b32.xlu0 %v446, 32
  %v551 = vpop.permute.xlu0 %550
  %v553 = vadd.f32 %v545, %v551
  %554 = vrot.lane.b32.xlu0 %v459, 32
  %v555 = vpop.permute.xlu0 %554
  %v557 = vadd.f32 %v549, %v555
  %558 = vrot.lane.b32.xlu0 %v446, 24
  %v559 = vpop.permute.xlu0 %558
  %v561 = vadd.f32 %v553, %v559
  %562 = vrot.lane.b32.xlu0 %v459, 24
  %v563 = vpop.permute.xlu0 %562
  %v565 = vadd.f32 %v557, %v563
  %566 = vrot.lane.b32.xlu0 %v446, 16
  %v567 = vpop.permute.xlu0 %566
  %v569 = vadd.f32 %v561, %v567
  %570 = vrot.lane.b32.xlu0 %v459, 16
  %v571 = vpop.permute.xlu0 %570
  %v573 = vadd.f32 %v565, %v571
  %574 = vrot.lane.b32.xlu0 %v446, 8
  %v575 = vpop.permute.xlu0 %574
  %v577 = vadd.f32 %v569, %v575
  %578 = vrot.lane.b32.xlu0 %v459, 8
  %v579 = vpop.permute.xlu0 %578
  %v581 = vadd.f32 %v573, %v579
  %v582 = vmul.f32 %v577, 0.001953125
  %v583 = vmul.f32 %v581, 0.001953125
  %v584 = vmul.f32 %v582, %v582
  %v585 = vsub.f32 %v583, %v584
  %v586 = vadd.f32 %v585, 1e-05
  %v587 = vrsqrt.pop %v586
  %v588 = vld [vmem:[%s2] sm:$0x1]
  %v589 = vmul.f32 %v588, %v587
  %v590 = vld [vmem:[%s3] sm:$0x1]
  %v591 = vmul.f32 %v582, %v589
  %v592 = vsub.f32 %v590, %v591
  %v594 = vlaneseq
  %v595 = vshrl.u32 %v594, 7
  %v596 = vsub.s32 0, %v595
  %v597 = vrot.slane %v589, %v596
  %598 = vrot.lane.b32.xlu0 %v597, 8
  %v599 = vpop.permute.xlu0 %598
  %601 = vrot.lane.b32.xlu0 %v597, 16
  %v602 = vpop.permute.xlu0 %601
  %604 = vrot.lane.b32.xlu0 %v597, 24
  %v605 = vpop.permute.xlu0 %604
  %607 = vrot.lane.b32.xlu0 %v597, 32
  %v608 = vpop.permute.xlu0 %607
  %610 = vrot.lane.b32.xlu0 %v597, 40
  %v611 = vpop.permute.xlu0 %610
  %613 = vrot.lane.b32.xlu0 %v597, 48
  %v614 = vpop.permute.xlu0 %613
  %616 = vrot.lane.b32.xlu0 %v597, 56
  %v617 = vpop.permute.xlu0 %616
  %619 = vrot.lane.b32.xlu0 %v597, 64
  %v620 = vpop.permute.xlu0 %619
  %622 = vrot.lane.b32.xlu0 %v597, 72
  %v623 = vpop.permute.xlu0 %622
  %625 = vrot.lane.b32.xlu0 %v597, 80
  %v626 = vpop.permute.xlu0 %625
  %628 = vrot.lane.b32.xlu0 %v597, 88
  %v629 = vpop.permute.xlu0 %628
  %631 = vrot.lane.b32.xlu0 %v597, 96
  %v632 = vpop.permute.xlu0 %631
  %634 = vrot.lane.b32.xlu0 %v597, 104
  %v635 = vpop.permute.xlu0 %634
  %637 = vrot.lane.b32.xlu0 %v597, 112
  %v638 = vpop.permute.xlu0 %637
  %640 = vrot.lane.b32.xlu0 %v597, 120
  %v641 = vpop.permute.xlu0 %640
  %vm643 = vcmask 64512
  %v644 = vsel %vm643, %v589, %v599
  %vm645 = vcmask 130048
  %v646 = vsel %vm645, %v644, %v602
  %vm647 = vcmask 195584
  %v648 = vsel %vm647, %v646, %v605
  %vm649 = vcmask 261120
  %v650 = vsel %vm649, %v648, %v608
  %vm651 = vcmask 326656
  %v652 = vsel %vm651, %v650, %v611
  %vm653 = vcmask 392192
  %v654 = vsel %vm653, %v652, %v614
  %vm655 = vcmask 457728
  %v656 = vsel %vm655, %v654, %v617
  %vm657 = vcmask 523264
  %v658 = vsel %vm657, %v656, %v620
  %vm659 = vcmask 588800
  %v660 = vsel %vm659, %v658, %v623
  %vm661 = vcmask 654336
  %v662 = vsel %vm661, %v660, %v626
  %vm663 = vcmask 719872
  %v664 = vsel %vm663, %v662, %v629
  %vm665 = vcmask 785408
  %v666 = vsel %vm665, %v664, %v632
  %vm667 = vcmask 850944
  %v668 = vsel %vm667, %v666, %v635
  %vm669 = vcmask 916480
  %v670 = vsel %vm669, %v668, %v638
  %vm671 = vcmask 982016
  %v672 = vsel %vm671, %v670, %v641
  %v674 = vlaneseq
  %v675 = vshrl.u32 %v674, 7
  %v676 = vsub.s32 0, %v675
  %v677 = vrot.slane %v592, %v676
  %678 = vrot.lane.b32.xlu0 %v677, 8
  %v679 = vpop.permute.xlu0 %678
  %681 = vrot.lane.b32.xlu0 %v677, 16
  %v682 = vpop.permute.xlu0 %681
  %684 = vrot.lane.b32.xlu0 %v677, 24
  %v685 = vpop.permute.xlu0 %684
  %687 = vrot.lane.b32.xlu0 %v677, 32
  %v688 = vpop.permute.xlu0 %687
  %690 = vrot.lane.b32.xlu0 %v677, 40
  %v691 = vpop.permute.xlu0 %690
  %693 = vrot.lane.b32.xlu0 %v677, 48
  %v694 = vpop.permute.xlu0 %693
  %696 = vrot.lane.b32.xlu0 %v677, 56
  %v697 = vpop.permute.xlu0 %696
  %699 = vrot.lane.b32.xlu0 %v677, 64
  %v700 = vpop.permute.xlu0 %699
  %702 = vrot.lane.b32.xlu0 %v677, 72
  %v703 = vpop.permute.xlu0 %702
  %705 = vrot.lane.b32.xlu0 %v677, 80
  %v706 = vpop.permute.xlu0 %705
  %708 = vrot.lane.b32.xlu0 %v677, 88
  %v709 = vpop.permute.xlu0 %708
  %711 = vrot.lane.b32.xlu0 %v677, 96
  %v712 = vpop.permute.xlu0 %711
  %714 = vrot.lane.b32.xlu0 %v677, 104
  %v715 = vpop.permute.xlu0 %714
  %717 = vrot.lane.b32.xlu0 %v677, 112
  %v718 = vpop.permute.xlu0 %717
  %720 = vrot.lane.b32.xlu0 %v677, 120
  %v721 = vpop.permute.xlu0 %720
  %v723 = vsel %vm643, %v592, %v679
  %v724 = vsel %vm645, %v723, %v682
  %v725 = vsel %vm647, %v724, %v685
  %v726 = vsel %vm649, %v725, %v688
  %v727 = vsel %vm651, %v726, %v691
  %v728 = vsel %vm653, %v727, %v694
  %v729 = vsel %vm655, %v728, %v697
  %v730 = vsel %vm657, %v729, %v700
  %v731 = vsel %vm659, %v730, %v703
  %v732 = vsel %vm661, %v731, %v706
  %v733 = vsel %vm663, %v732, %v709
  %v734 = vsel %vm665, %v733, %v712
  %v735 = vsel %vm667, %v734, %v715
  %v736 = vsel %vm669, %v735, %v718
  %v737 = vsel %vm671, %v736, %v721
  %v738 = vlaneseq
  %v739 = vshrl.u32 %v738, 7
  %v740 = vsub.s32 0, %v739
  %v741 = vrot.slane %v672, %v740
  %v742 = vmul.f32 %v434, %v741
  %v743 = vmul.f32 %v435, %v741
  %v744 = vmul.f32 %v436, %v741
  %v745 = vmul.f32 %v437, %v741
  %v746 = vlaneseq
  %v747 = vshrl.u32 %v746, 7
  %v748 = vsub.s32 0, %v747
  %v749 = vrot.slane %v737, %v748
  %v750 = vadd.f32 %v742, %v749
  %v751 = vadd.f32 %v743, %v749
  %v752 = vadd.f32 %v744, %v749
  %v753 = vadd.f32 %v745, %v749
  %v754 = vmax.f32 %v750, 0.0
  %v755 = vmax.f32 %v751, 0.0
  %v756 = vmax.f32 %v752, 0.0
  %v757 = vmax.f32 %v753, 0.0
  %v762 = vrot.slane %v754, 1
  %v763 = vrot.slane %v755, 1
  %v764 = vsel %vm87, %v762, %v763
  %v765 = vrot.slane %v756, 1
  %v766 = vsel %vm87, %v763, %v765
  %v767 = vrot.slane %v757, 1
  %v768 = vsel %vm87, %v765, %v767
  %v773 = vsel %vm87, %v767, 0.0
  %v774 = vsel %vm100, %v764, 0.0
  %v775 = vsel %vm101, %v766, 0.0
  %v776 = vsel %vm102, %v768, 0.0
  %v777 = vsel %vm103, %v773, 0.0
  %v778 = vrot.slane %v754, 7
  %v779 = vrot.slane %v755, 7
  %v780 = vsel %vm108, %v778, %v779
  %v781 = vrot.slane %v756, 7
  %v782 = vsel %vm108, %v779, %v781
  %v783 = vrot.slane %v757, 7
  %v784 = vsel %vm108, %v781, %v783
  %v789 = vsel %vm108, 0.0, %v778
  %v790 = vsel %vm121, %v789, 0.0
  %v791 = vsel %vm122, %v780, 0.0
  %v792 = vsel %vm123, %v782, 0.0
  %v793 = vsel %vm124, %v784, 0.0
  %s794 = scalar_lea.vmem %s4, 128
  %v795 = vld [vmem:[%s794] sm:$0xff]
  %v796 = vld [vmem:[%s794 + $0x8] sm:$0xff]
  %v797 = vld [vmem:[%s794 + $0x10] sm:$0xff]
  %v798 = vld [vmem:[%s794 + $0x18] sm:$0xff]
  %v799 = vld [vmem:[%s794 + $0x20] sm:$0xff]
  %v800 = vld [vmem:[%s794 + $0x28] sm:$0xff]
  %v801 = vld [vmem:[%s794 + $0x30] sm:$0xff]
  %v802 = vld [vmem:[%s794 + $0x38] sm:$0xff]
  %v803 = vld [vmem:[%s794 + $0x40] sm:$0xff]
  %v804 = vld [vmem:[%s794 + $0x48] sm:$0xff]
  %v805 = vld [vmem:[%s794 + $0x50] sm:$0xff]
  %v806 = vld [vmem:[%s794 + $0x58] sm:$0xff]
  %v807 = vld [vmem:[%s794 + $0x60] sm:$0xff]
  %v808 = vld [vmem:[%s794 + $0x68] sm:$0xff]
  %v809 = vld [vmem:[%s794 + $0x70] sm:$0xff]
  %v810 = vld [vmem:[%s794 + $0x78] sm:$0xff]
  %s811 = scalar_lea.vmem %s4, 256
  %v812 = vld [vmem:[%s811] sm:$0xff]
  %v813 = vld [vmem:[%s811 + $0x8] sm:$0xff]
  %v814 = vld [vmem:[%s811 + $0x10] sm:$0xff]
  %v815 = vld [vmem:[%s811 + $0x18] sm:$0xff]
  %v816 = vld [vmem:[%s811 + $0x20] sm:$0xff]
  %v817 = vld [vmem:[%s811 + $0x28] sm:$0xff]
  %v818 = vld [vmem:[%s811 + $0x30] sm:$0xff]
  %v819 = vld [vmem:[%s811 + $0x38] sm:$0xff]
  %v820 = vld [vmem:[%s811 + $0x40] sm:$0xff]
  %v821 = vld [vmem:[%s811 + $0x48] sm:$0xff]
  %v822 = vld [vmem:[%s811 + $0x50] sm:$0xff]
  %v823 = vld [vmem:[%s811 + $0x58] sm:$0xff]
  %v824 = vld [vmem:[%s811 + $0x60] sm:$0xff]
  %v825 = vld [vmem:[%s811 + $0x68] sm:$0xff]
  %v826 = vld [vmem:[%s811 + $0x70] sm:$0xff]
  %v827 = vld [vmem:[%s811 + $0x78] sm:$0xff]
  %828 = vmatprep.subr.mxu0 0.0
  %829 = vmatpush1.msra.mxu0 %v812
  %830 = vmatprep.subr.mxu0 0.0
  %831 = vmatpush1.msra.mxu0 %v813
  %832 = vmatprep.subr.mxu0 0.0
  %833 = vmatpush1.msra.mxu0 %v814
  %834 = vmatprep.subr.mxu0 0.0
  %835 = vmatpush1.msra.mxu0 %v815
  %836 = vmatprep.subr.mxu0 0.0
  %837 = vmatpush1.msra.mxu0 %v816
  %838 = vmatprep.subr.mxu0 0.0
  %839 = vmatpush1.msra.mxu0 %v817
  %840 = vmatprep.subr.mxu0 0.0
  %841 = vmatpush1.msra.mxu0 %v818
  %842 = vmatprep.subr.mxu0 0.0
  %843 = vmatpush1.msra.mxu0 %v819
  %844 = vmatprep.subr.mxu0 0.0
  %845 = vmatpush1.msra.mxu0 %v820
  %846 = vmatprep.subr.mxu0 0.0
  %847 = vmatpush1.msra.mxu0 %v821
  %848 = vmatprep.subr.mxu0 0.0
  %849 = vmatpush1.msra.mxu0 %v822
  %850 = vmatprep.subr.mxu0 0.0
  %851 = vmatpush1.msra.mxu0 %v823
  %852 = vmatprep.subr.mxu0 0.0
  %853 = vmatpush1.msra.mxu0 %v824
  %854 = vmatprep.subr.mxu0 0.0
  %855 = vmatpush1.msra.mxu0 %v825
  %856 = vmatprep.subr.mxu0 0.0
  %857 = vmatpush1.msra.mxu0 %v826
  %858 = vmatprep.subr.mxu0 0.0
  %859 = vmatpush1.msra.mxu0 %v827
  %860 = vmatprep.subr.mxu0 0.0
  %861 = vmatpush1.msra.mxu0 0.0
  %862 = vmatprep.subr.mxu0 0.0
  %863 = vmatpush1.msra.mxu0 0.0
  %864 = vmatprep.subr.mxu0 0.0
  %865 = vmatpush1.msra.mxu0 0.0
  %866 = vmatprep.subr.mxu0 0.0
  %867 = vmatpush1.msra.mxu0 0.0
  %868 = vmatprep.subr.mxu0 0.0
  %869 = vmatpush1.msra.mxu0 0.0
  %870 = vmatprep.subr.mxu0 0.0
  %871 = vmatpush1.msra.mxu0 0.0
  %872 = vmatprep.subr.mxu0 0.0
  %873 = vmatpush1.msra.mxu0 0.0
  %874 = vmatprep.subr.mxu0 0.0
  %875 = vmatpush1.msra.mxu0 0.0
  %876 = vmatprep.subr.mxu0 0.0
  %877 = vmatpush1.msra.mxu0 0.0
  %878 = vmatprep.subr.mxu0 0.0
  %879 = vmatpush1.msra.mxu0 0.0
  %880 = vmatprep.subr.mxu0 0.0
  %881 = vmatpush1.msra.mxu0 0.0
  %882 = vmatprep.subr.mxu0 0.0
  %883 = vmatpush1.msra.mxu0 0.0
  %884 = vmatprep.subr.mxu0 0.0
  %885 = vmatpush1.msra.mxu0 0.0
  %886 = vmatprep.subr.mxu0 0.0
  %887 = vmatpush1.msra.mxu0 0.0
  %888 = vmatprep.subr.mxu0 0.0
  %889 = vmatpush1.msra.mxu0 0.0
  %890 = vmatprep.subr.mxu0 0.0
  %891 = vmatpush1.msra.mxu0 0.0
  %892 = vmatprep.mubr.f32.mxu0 0.0
  %893 = vmatmul.mubr.f32.gmra.mrb[0].mxu0 %v774
  %v894 = vpop.f32.mrb[0].mxu0
  %v895 = vadd.f32 0.0, %v894
  %v896 = vpop.f32.mrb[0].mxu0
  %897 = vmatprep.mubr.f32.mxu0 0.0
  %898 = vmatmul.mubr.f32.gmra.mrb[0].mxu0 %v775
  %v899 = vpop.f32.mrb[0].mxu0
  %v900 = vadd.f32 0.0, %v899
  %v901 = vpop.f32.mrb[0].mxu0
  %902 = vmatprep.mubr.f32.mxu0 0.0
  %903 = vmatmul.mubr.f32.gmra.mrb[0].mxu0 %v776
  %v904 = vpop.f32.mrb[0].mxu0
  %v905 = vadd.f32 0.0, %v904
  %v906 = vpop.f32.mrb[0].mxu0
  %907 = vmatprep.mubr.f32.mxu0 0.0
  %908 = vmatmul.mubr.f32.gmra.mrb[0].mxu0 %v777
  %v909 = vpop.f32.mrb[0].mxu0
  %v910 = vadd.f32 0.0, %v909
  %v911 = vpop.f32.mrb[0].mxu0
  %912 = vdwg.mxu0
  %913 = vmatprep.subr.mxu0 0.0
  %914 = vmatpush1.msra.mxu0 %v795
  %915 = vmatprep.subr.mxu0 0.0
  %916 = vmatpush1.msra.mxu0 %v796
  %917 = vmatprep.subr.mxu0 0.0
  %918 = vmatpush1.msra.mxu0 %v797
  %919 = vmatprep.subr.mxu0 0.0
  %920 = vmatpush1.msra.mxu0 %v798
  %921 = vmatprep.subr.mxu0 0.0
  %922 = vmatpush1.msra.mxu0 %v799
  %923 = vmatprep.subr.mxu0 0.0
  %924 = vmatpush1.msra.mxu0 %v800
  %925 = vmatprep.subr.mxu0 0.0
  %926 = vmatpush1.msra.mxu0 %v801
  %927 = vmatprep.subr.mxu0 0.0
  %928 = vmatpush1.msra.mxu0 %v802
  %929 = vmatprep.subr.mxu0 0.0
  %930 = vmatpush1.msra.mxu0 %v803
  %931 = vmatprep.subr.mxu0 0.0
  %932 = vmatpush1.msra.mxu0 %v804
  %933 = vmatprep.subr.mxu0 0.0
  %934 = vmatpush1.msra.mxu0 %v805
  %935 = vmatprep.subr.mxu0 0.0
  %936 = vmatpush1.msra.mxu0 %v806
  %937 = vmatprep.subr.mxu0 0.0
  %938 = vmatpush1.msra.mxu0 %v807
  %939 = vmatprep.subr.mxu0 0.0
  %940 = vmatpush1.msra.mxu0 %v808
  %941 = vmatprep.subr.mxu0 0.0
  %942 = vmatpush1.msra.mxu0 %v809
  %943 = vmatprep.subr.mxu0 0.0
  %944 = vmatpush1.msra.mxu0 %v810
  %945 = vmatprep.subr.mxu0 0.0
  %946 = vmatpush1.msra.mxu0 0.0
  %947 = vmatprep.subr.mxu0 0.0
  %948 = vmatpush1.msra.mxu0 0.0
  %949 = vmatprep.subr.mxu0 0.0
  %950 = vmatpush1.msra.mxu0 0.0
  %951 = vmatprep.subr.mxu0 0.0
  %952 = vmatpush1.msra.mxu0 0.0
  %953 = vmatprep.subr.mxu0 0.0
  %954 = vmatpush1.msra.mxu0 0.0
  %955 = vmatprep.subr.mxu0 0.0
  %956 = vmatpush1.msra.mxu0 0.0
  %957 = vmatprep.subr.mxu0 0.0
  %958 = vmatpush1.msra.mxu0 0.0
  %959 = vmatprep.subr.mxu0 0.0
  %960 = vmatpush1.msra.mxu0 0.0
  %961 = vmatprep.subr.mxu0 0.0
  %962 = vmatpush1.msra.mxu0 0.0
  %963 = vmatprep.subr.mxu0 0.0
  %964 = vmatpush1.msra.mxu0 0.0
  %965 = vmatprep.subr.mxu0 0.0
  %966 = vmatpush1.msra.mxu0 0.0
  %967 = vmatprep.subr.mxu0 0.0
  %968 = vmatpush1.msra.mxu0 0.0
  %969 = vmatprep.subr.mxu0 0.0
  %970 = vmatpush1.msra.mxu0 0.0
  %971 = vmatprep.subr.mxu0 0.0
  %972 = vmatpush1.msra.mxu0 0.0
  %973 = vmatprep.subr.mxu0 0.0
  %974 = vmatpush1.msra.mxu0 0.0
  %975 = vmatprep.subr.mxu0 0.0
  %976 = vmatpush1.msra.mxu0 0.0
  %977 = vmatprep.mubr.f32.mxu0 0.0
  %978 = vmatmul.mubr.f32.gmra.mrb[0].mxu0 %v754
  %v979 = vpop.f32.mrb[0].mxu0
  %v980 = vadd.f32 %v895, %v979
  %v981 = vpop.f32.mrb[0].mxu0
  %982 = vmatprep.mubr.f32.mxu0 0.0
  %983 = vmatmul.mubr.f32.gmra.mrb[0].mxu0 %v755
  %v984 = vpop.f32.mrb[0].mxu0
  %v985 = vadd.f32 %v900, %v984
  %v986 = vpop.f32.mrb[0].mxu0
  %987 = vmatprep.mubr.f32.mxu0 0.0
  %988 = vmatmul.mubr.f32.gmra.mrb[0].mxu0 %v756
  %v989 = vpop.f32.mrb[0].mxu0
  %v990 = vadd.f32 %v905, %v989
  %v991 = vpop.f32.mrb[0].mxu0
  %992 = vmatprep.mubr.f32.mxu0 0.0
  %993 = vmatmul.mubr.f32.gmra.mrb[0].mxu0 %v757
  %v994 = vpop.f32.mrb[0].mxu0
  %v995 = vadd.f32 %v910, %v994
  %v996 = vpop.f32.mrb[0].mxu0
  %997 = vdwg.mxu0
  %v998 = vld [vmem:[%s4] sm:$0xff]
  %v999 = vld [vmem:[%s4 + $0x8] sm:$0xff]
  %v1000 = vld [vmem:[%s4 + $0x10] sm:$0xff]
  %v1001 = vld [vmem:[%s4 + $0x18] sm:$0xff]
  %v1002 = vld [vmem:[%s4 + $0x20] sm:$0xff]
  %v1003 = vld [vmem:[%s4 + $0x28] sm:$0xff]
  %v1004 = vld [vmem:[%s4 + $0x30] sm:$0xff]
  %v1005 = vld [vmem:[%s4 + $0x38] sm:$0xff]
  %v1006 = vld [vmem:[%s4 + $0x40] sm:$0xff]
  %v1007 = vld [vmem:[%s4 + $0x48] sm:$0xff]
  %v1008 = vld [vmem:[%s4 + $0x50] sm:$0xff]
  %v1009 = vld [vmem:[%s4 + $0x58] sm:$0xff]
  %v1010 = vld [vmem:[%s4 + $0x60] sm:$0xff]
  %v1011 = vld [vmem:[%s4 + $0x68] sm:$0xff]
  %v1012 = vld [vmem:[%s4 + $0x70] sm:$0xff]
  %v1013 = vld [vmem:[%s4 + $0x78] sm:$0xff]
  %1014 = vmatprep.subr.mxu0 0.0
  %1015 = vmatpush1.msra.mxu0 %v998
  %1016 = vmatprep.subr.mxu0 0.0
  %1017 = vmatpush1.msra.mxu0 %v999
  %1018 = vmatprep.subr.mxu0 0.0
  %1019 = vmatpush1.msra.mxu0 %v1000
  %1020 = vmatprep.subr.mxu0 0.0
  %1021 = vmatpush1.msra.mxu0 %v1001
  %1022 = vmatprep.subr.mxu0 0.0
  %1023 = vmatpush1.msra.mxu0 %v1002
  %1024 = vmatprep.subr.mxu0 0.0
  %1025 = vmatpush1.msra.mxu0 %v1003
  %1026 = vmatprep.subr.mxu0 0.0
  %1027 = vmatpush1.msra.mxu0 %v1004
  %1028 = vmatprep.subr.mxu0 0.0
  %1029 = vmatpush1.msra.mxu0 %v1005
  %1030 = vmatprep.subr.mxu0 0.0
  %1031 = vmatpush1.msra.mxu0 %v1006
  %1032 = vmatprep.subr.mxu0 0.0
  %1033 = vmatpush1.msra.mxu0 %v1007
  %1034 = vmatprep.subr.mxu0 0.0
  %1035 = vmatpush1.msra.mxu0 %v1008
  %1036 = vmatprep.subr.mxu0 0.0
  %1037 = vmatpush1.msra.mxu0 %v1009
  %1038 = vmatprep.subr.mxu0 0.0
  %1039 = vmatpush1.msra.mxu0 %v1010
  %1040 = vmatprep.subr.mxu0 0.0
  %1041 = vmatpush1.msra.mxu0 %v1011
  %1042 = vmatprep.subr.mxu0 0.0
  %1043 = vmatpush1.msra.mxu0 %v1012
  %1044 = vmatprep.subr.mxu0 0.0
  %1045 = vmatpush1.msra.mxu0 %v1013
  %1046 = vmatprep.subr.mxu0 0.0
  %1047 = vmatpush1.msra.mxu0 0.0
  %1048 = vmatprep.subr.mxu0 0.0
  %1049 = vmatpush1.msra.mxu0 0.0
  %1050 = vmatprep.subr.mxu0 0.0
  %1051 = vmatpush1.msra.mxu0 0.0
  %1052 = vmatprep.subr.mxu0 0.0
  %1053 = vmatpush1.msra.mxu0 0.0
  %1054 = vmatprep.subr.mxu0 0.0
  %1055 = vmatpush1.msra.mxu0 0.0
  %1056 = vmatprep.subr.mxu0 0.0
  %1057 = vmatpush1.msra.mxu0 0.0
  %1058 = vmatprep.subr.mxu0 0.0
  %1059 = vmatpush1.msra.mxu0 0.0
  %1060 = vmatprep.subr.mxu0 0.0
  %1061 = vmatpush1.msra.mxu0 0.0
  %1062 = vmatprep.subr.mxu0 0.0
  %1063 = vmatpush1.msra.mxu0 0.0
  %1064 = vmatprep.subr.mxu0 0.0
  %1065 = vmatpush1.msra.mxu0 0.0
  %1066 = vmatprep.subr.mxu0 0.0
  %1067 = vmatpush1.msra.mxu0 0.0
  %1068 = vmatprep.subr.mxu0 0.0
  %1069 = vmatpush1.msra.mxu0 0.0
  %1070 = vmatprep.subr.mxu0 0.0
  %1071 = vmatpush1.msra.mxu0 0.0
  %1072 = vmatprep.subr.mxu0 0.0
  %1073 = vmatpush1.msra.mxu0 0.0
  %1074 = vmatprep.subr.mxu0 0.0
  %1075 = vmatpush1.msra.mxu0 0.0
  %1076 = vmatprep.subr.mxu0 0.0
  %1077 = vmatpush1.msra.mxu0 0.0
  %1078 = vmatprep.mubr.f32.mxu0 0.0
  %1079 = vmatmul.mubr.f32.gmra.mrb[0].mxu0 %v790
  %v1080 = vpop.f32.mrb[0].mxu0
  %v1081 = vadd.f32 0.0, %v1080
  %v1082 = vpop.f32.mrb[0].mxu0
  %1083 = vmatprep.mubr.f32.mxu0 0.0
  %1084 = vmatmul.mubr.f32.gmra.mrb[0].mxu0 %v791
  %v1085 = vpop.f32.mrb[0].mxu0
  %v1086 = vadd.f32 0.0, %v1085
  %v1087 = vpop.f32.mrb[0].mxu0
  %1088 = vmatprep.mubr.f32.mxu0 0.0
  %1089 = vmatmul.mubr.f32.gmra.mrb[0].mxu0 %v792
  %v1090 = vpop.f32.mrb[0].mxu0
  %v1091 = vadd.f32 0.0, %v1090
  %v1092 = vpop.f32.mrb[0].mxu0
  %1093 = vmatprep.mubr.f32.mxu0 0.0
  %1094 = vmatmul.mubr.f32.gmra.mrb[0].mxu0 %v793
  %v1095 = vpop.f32.mrb[0].mxu0
  %v1096 = vadd.f32 0.0, %v1095
  %v1097 = vpop.f32.mrb[0].mxu0
  %1098 = vdwg.mxu0
  %v1099 = vadd.f32 %v980, %v1081
  %v1100 = vadd.f32 %v985, %v1086
  %v1101 = vadd.f32 %v990, %v1091
  %v1102 = vadd.f32 %v995, %v1096
  %v1103 = vadd.f32 %v1099, %v1100
  %v1104 = vadd.f32 %v1103, %v1101
  %v1105 = vadd.f32 %v1104, %v1102
  %v1106 = vrot.slane %v1105, 4
  %v1107 = vadd.f32 %v1105, %v1106
  %v1108 = vrot.slane %v1107, 2
  %v1109 = vadd.f32 %v1107, %v1108
  %v1110 = vrot.slane %v1109, 1
  %v1111 = vadd.f32 %v1109, %v1110
  %v1112 = vmul.f32 %v1099, %v1099
  %v1113 = vmul.f32 %v1100, %v1100
  %v1114 = vmul.f32 %v1101, %v1101
  %v1115 = vmul.f32 %v1102, %v1102
  %v1116 = vadd.f32 %v1112, %v1113
  %v1117 = vadd.f32 %v1116, %v1114
  %v1118 = vadd.f32 %v1117, %v1115
  %v1119 = vrot.slane %v1118, 4
  %v1120 = vadd.f32 %v1118, %v1119
  %v1121 = vrot.slane %v1120, 2
  %v1122 = vadd.f32 %v1120, %v1121
  %v1123 = vrot.slane %v1122, 1
  %v1124 = vadd.f32 %v1122, %v1123
  %1126 = vrot.lane.b32.xlu0 %v1111, 120
  %v1127 = vpop.permute.xlu0 %1126
  %v1129 = vadd.f32 %v1111, %v1127
  %1131 = vrot.lane.b32.xlu0 %v1124, 120
  %v1132 = vpop.permute.xlu0 %1131
  %v1134 = vadd.f32 %v1124, %v1132
  %1135 = vrot.lane.b32.xlu0 %v1111, 112
  %v1136 = vpop.permute.xlu0 %1135
  %v1138 = vadd.f32 %v1129, %v1136
  %1139 = vrot.lane.b32.xlu0 %v1124, 112
  %v1140 = vpop.permute.xlu0 %1139
  %v1142 = vadd.f32 %v1134, %v1140
  %1143 = vrot.lane.b32.xlu0 %v1111, 104
  %v1144 = vpop.permute.xlu0 %1143
  %v1146 = vadd.f32 %v1138, %v1144
  %1147 = vrot.lane.b32.xlu0 %v1124, 104
  %v1148 = vpop.permute.xlu0 %1147
  %v1150 = vadd.f32 %v1142, %v1148
  %1151 = vrot.lane.b32.xlu0 %v1111, 96
  %v1152 = vpop.permute.xlu0 %1151
  %v1154 = vadd.f32 %v1146, %v1152
  %1155 = vrot.lane.b32.xlu0 %v1124, 96
  %v1156 = vpop.permute.xlu0 %1155
  %v1158 = vadd.f32 %v1150, %v1156
  %1159 = vrot.lane.b32.xlu0 %v1111, 88
  %v1160 = vpop.permute.xlu0 %1159
  %v1162 = vadd.f32 %v1154, %v1160
  %1163 = vrot.lane.b32.xlu0 %v1124, 88
  %v1164 = vpop.permute.xlu0 %1163
  %v1166 = vadd.f32 %v1158, %v1164
  %1167 = vrot.lane.b32.xlu0 %v1111, 80
  %v1168 = vpop.permute.xlu0 %1167
  %v1170 = vadd.f32 %v1162, %v1168
  %1171 = vrot.lane.b32.xlu0 %v1124, 80
  %v1172 = vpop.permute.xlu0 %1171
  %v1174 = vadd.f32 %v1166, %v1172
  %1175 = vrot.lane.b32.xlu0 %v1111, 72
  %v1176 = vpop.permute.xlu0 %1175
  %v1178 = vadd.f32 %v1170, %v1176
  %1179 = vrot.lane.b32.xlu0 %v1124, 72
  %v1180 = vpop.permute.xlu0 %1179
  %v1182 = vadd.f32 %v1174, %v1180
  %1183 = vrot.lane.b32.xlu0 %v1111, 64
  %v1184 = vpop.permute.xlu0 %1183
  %v1186 = vadd.f32 %v1178, %v1184
  %1187 = vrot.lane.b32.xlu0 %v1124, 64
  %v1188 = vpop.permute.xlu0 %1187
  %v1190 = vadd.f32 %v1182, %v1188
  %1191 = vrot.lane.b32.xlu0 %v1111, 56
  %v1192 = vpop.permute.xlu0 %1191
  %v1194 = vadd.f32 %v1186, %v1192
  %1195 = vrot.lane.b32.xlu0 %v1124, 56
  %v1196 = vpop.permute.xlu0 %1195
  %v1198 = vadd.f32 %v1190, %v1196
  %1199 = vrot.lane.b32.xlu0 %v1111, 48
  %v1200 = vpop.permute.xlu0 %1199
  %v1202 = vadd.f32 %v1194, %v1200
  %1203 = vrot.lane.b32.xlu0 %v1124, 48
  %v1204 = vpop.permute.xlu0 %1203
  %v1206 = vadd.f32 %v1198, %v1204
  %1207 = vrot.lane.b32.xlu0 %v1111, 40
  %v1208 = vpop.permute.xlu0 %1207
  %v1210 = vadd.f32 %v1202, %v1208
  %1211 = vrot.lane.b32.xlu0 %v1124, 40
  %v1212 = vpop.permute.xlu0 %1211
  %v1214 = vadd.f32 %v1206, %v1212
  %1215 = vrot.lane.b32.xlu0 %v1111, 32
  %v1216 = vpop.permute.xlu0 %1215
  %v1218 = vadd.f32 %v1210, %v1216
  %1219 = vrot.lane.b32.xlu0 %v1124, 32
  %v1220 = vpop.permute.xlu0 %1219
  %v1222 = vadd.f32 %v1214, %v1220
  %1223 = vrot.lane.b32.xlu0 %v1111, 24
  %v1224 = vpop.permute.xlu0 %1223
  %v1226 = vadd.f32 %v1218, %v1224
  %1227 = vrot.lane.b32.xlu0 %v1124, 24
  %v1228 = vpop.permute.xlu0 %1227
  %v1230 = vadd.f32 %v1222, %v1228
  %1231 = vrot.lane.b32.xlu0 %v1111, 16
  %v1232 = vpop.permute.xlu0 %1231
  %v1234 = vadd.f32 %v1226, %v1232
  %1235 = vrot.lane.b32.xlu0 %v1124, 16
  %v1236 = vpop.permute.xlu0 %1235
  %v1238 = vadd.f32 %v1230, %v1236
  %1239 = vrot.lane.b32.xlu0 %v1111, 8
  %v1240 = vpop.permute.xlu0 %1239
  %v1242 = vadd.f32 %v1234, %v1240
  %1243 = vrot.lane.b32.xlu0 %v1124, 8
  %v1244 = vpop.permute.xlu0 %1243
  %v1246 = vadd.f32 %v1238, %v1244
  %v1247 = vmul.f32 %v1242, 0.001953125
  %v1248 = vmul.f32 %v1246, 0.001953125
  %v1249 = vmul.f32 %v1247, %v1247
  %v1250 = vsub.f32 %v1248, %v1249
  %v1251 = vadd.f32 %v1250, 1e-05
  %v1252 = vrsqrt.pop %v1251
  %v1253 = vld [vmem:[%s5] sm:$0x1]
  %v1254 = vmul.f32 %v1253, %v1252
  %v1255 = vld [vmem:[%s6] sm:$0x1]
  %v1256 = vmul.f32 %v1247, %v1254
  %v1257 = vsub.f32 %v1255, %v1256
  %v1259 = vlaneseq
  %v1260 = vshrl.u32 %v1259, 7
  %v1261 = vsub.s32 0, %v1260
  %v1262 = vrot.slane %v1254, %v1261
  %1263 = vrot.lane.b32.xlu0 %v1262, 8
  %v1264 = vpop.permute.xlu0 %1263
  %1266 = vrot.lane.b32.xlu0 %v1262, 16
  %v1267 = vpop.permute.xlu0 %1266
  %1269 = vrot.lane.b32.xlu0 %v1262, 24
  %v1270 = vpop.permute.xlu0 %1269
  %1272 = vrot.lane.b32.xlu0 %v1262, 32
  %v1273 = vpop.permute.xlu0 %1272
  %1275 = vrot.lane.b32.xlu0 %v1262, 40
  %v1276 = vpop.permute.xlu0 %1275
  %1278 = vrot.lane.b32.xlu0 %v1262, 48
  %v1279 = vpop.permute.xlu0 %1278
  %1281 = vrot.lane.b32.xlu0 %v1262, 56
  %v1282 = vpop.permute.xlu0 %1281
  %1284 = vrot.lane.b32.xlu0 %v1262, 64
  %v1285 = vpop.permute.xlu0 %1284
  %1287 = vrot.lane.b32.xlu0 %v1262, 72
  %v1288 = vpop.permute.xlu0 %1287
  %1290 = vrot.lane.b32.xlu0 %v1262, 80
  %v1291 = vpop.permute.xlu0 %1290
  %1293 = vrot.lane.b32.xlu0 %v1262, 88
  %v1294 = vpop.permute.xlu0 %1293
  %1296 = vrot.lane.b32.xlu0 %v1262, 96
  %v1297 = vpop.permute.xlu0 %1296
  %1299 = vrot.lane.b32.xlu0 %v1262, 104
  %v1300 = vpop.permute.xlu0 %1299
  %1302 = vrot.lane.b32.xlu0 %v1262, 112
  %v1303 = vpop.permute.xlu0 %1302
  %1305 = vrot.lane.b32.xlu0 %v1262, 120
  %v1306 = vpop.permute.xlu0 %1305
  %v1308 = vsel %vm643, %v1254, %v1264
  %v1309 = vsel %vm645, %v1308, %v1267
  %v1310 = vsel %vm647, %v1309, %v1270
  %v1311 = vsel %vm649, %v1310, %v1273
  %v1312 = vsel %vm651, %v1311, %v1276
  %v1313 = vsel %vm653, %v1312, %v1279
  %v1314 = vsel %vm655, %v1313, %v1282
  %v1315 = vsel %vm657, %v1314, %v1285
  %v1316 = vsel %vm659, %v1315, %v1288
  %v1317 = vsel %vm661, %v1316, %v1291
  %v1318 = vsel %vm663, %v1317, %v1294
  %v1319 = vsel %vm665, %v1318, %v1297
  %v1320 = vsel %vm667, %v1319, %v1300
  %v1321 = vsel %vm669, %v1320, %v1303
  %v1322 = vsel %vm671, %v1321, %v1306
  %v1324 = vlaneseq
  %v1325 = vshrl.u32 %v1324, 7
  %v1326 = vsub.s32 0, %v1325
  %v1327 = vrot.slane %v1257, %v1326
  %1328 = vrot.lane.b32.xlu0 %v1327, 8
  %v1329 = vpop.permute.xlu0 %1328
  %1331 = vrot.lane.b32.xlu0 %v1327, 16
  %v1332 = vpop.permute.xlu0 %1331
  %1334 = vrot.lane.b32.xlu0 %v1327, 24
  %v1335 = vpop.permute.xlu0 %1334
  %1337 = vrot.lane.b32.xlu0 %v1327, 32
  %v1338 = vpop.permute.xlu0 %1337
  %1340 = vrot.lane.b32.xlu0 %v1327, 40
  %v1341 = vpop.permute.xlu0 %1340
  %1343 = vrot.lane.b32.xlu0 %v1327, 48
  %v1344 = vpop.permute.xlu0 %1343
  %1346 = vrot.lane.b32.xlu0 %v1327, 56
  %v1347 = vpop.permute.xlu0 %1346
  %1349 = vrot.lane.b32.xlu0 %v1327, 64
  %v1350 = vpop.permute.xlu0 %1349
  %1352 = vrot.lane.b32.xlu0 %v1327, 72
  %v1353 = vpop.permute.xlu0 %1352
  %1355 = vrot.lane.b32.xlu0 %v1327, 80
  %v1356 = vpop.permute.xlu0 %1355
  %1358 = vrot.lane.b32.xlu0 %v1327, 88
  %v1359 = vpop.permute.xlu0 %1358
  %1361 = vrot.lane.b32.xlu0 %v1327, 96
  %v1362 = vpop.permute.xlu0 %1361
  %1364 = vrot.lane.b32.xlu0 %v1327, 104
  %v1365 = vpop.permute.xlu0 %1364
  %1367 = vrot.lane.b32.xlu0 %v1327, 112
  %v1368 = vpop.permute.xlu0 %1367
  %1370 = vrot.lane.b32.xlu0 %v1327, 120
  %v1371 = vpop.permute.xlu0 %1370
  %v1373 = vsel %vm643, %v1257, %v1329
  %v1374 = vsel %vm645, %v1373, %v1332
  %v1375 = vsel %vm647, %v1374, %v1335
  %v1376 = vsel %vm649, %v1375, %v1338
  %v1377 = vsel %vm651, %v1376, %v1341
  %v1378 = vsel %vm653, %v1377, %v1344
  %v1379 = vsel %vm655, %v1378, %v1347
  %v1380 = vsel %vm657, %v1379, %v1350
  %v1381 = vsel %vm659, %v1380, %v1353
  %v1382 = vsel %vm661, %v1381, %v1356
  %v1383 = vsel %vm663, %v1382, %v1359
  %v1384 = vsel %vm665, %v1383, %v1362
  %v1385 = vsel %vm667, %v1384, %v1365
  %v1386 = vsel %vm669, %v1385, %v1368
  %v1387 = vsel %vm671, %v1386, %v1371
  %v1388 = vlaneseq
  %v1389 = vshrl.u32 %v1388, 7
  %v1390 = vsub.s32 0, %v1389
  %v1391 = vrot.slane %v1322, %v1390
  %v1392 = vmul.f32 %v1099, %v1391
  %v1393 = vmul.f32 %v1100, %v1391
  %v1394 = vmul.f32 %v1101, %v1391
  %v1395 = vmul.f32 %v1102, %v1391
  %v1396 = vlaneseq
  %v1397 = vshrl.u32 %v1396, 7
  %v1398 = vsub.s32 0, %v1397
  %v1399 = vrot.slane %v1387, %v1398
  %v1400 = vadd.f32 %v1392, %v1399
  %v1401 = vadd.f32 %v1393, %v1399
  %v1402 = vadd.f32 %v1394, %v1399
  %v1403 = vadd.f32 %v1395, %v1399
  %v1404 = vadd.f32 %v1400, %v26
  %v1405 = vadd.f32 %v1401, %v27
  %v1406 = vadd.f32 %v1402, %v28
  %v1407 = vadd.f32 %v1403, %v29
  %v1408 = vmax.f32 %v1404, 0.0
  %v1409 = vmax.f32 %v1405, 0.0
  %v1410 = vmax.f32 %v1406, 0.0
  %v1411 = vmax.f32 %v1407, 0.0
  %1412 = vst [vmem:[%s7] sm:$0xff] %v1408
  %1413 = vst [vmem:[%s7 + $0x8] sm:$0xff] %v1409
  %1414 = vst [vmem:[%s7 + $0x10] sm:$0xff] %v1410
  %1415 = vst [vmem:[%s7 + $0x18] sm:$0xff] %v1411
  // Predicated region
  $region30: #{residual_block.1} parent=0 // pred_check
    _
  $region31: #{residual_block.1} parent=0 // pred_check_branch
    %1417 = sbr.rel (0) target = $region33
  $region32: #{residual_block.1} parent=0 // pred_region
    _
  $region33: #{residual_block.1} parent=0 // pred_fallthru
    _
  // Predicated region
  $region34: #{residual_block.1} parent=0 // pred_check
    _
  $region35: #{residual_block.1} parent=0 // pred_check_branch
    %1419 = sbr.rel (0) target = $region37
  $region36: #{residual_block.1} parent=0 // pred_region
    _
  $region37: #{residual_block.1} parent=0 // pred_fallthru
    _

</llo_original>
